<compile_context>
chip_gen: v6e
topology: v6e:2x2x1
jax: 0.10.0
libtpu: 0.0.40
codegen_flags: <defaults>
</compile_context>

<pallas_src>
import jax
import jax.numpy as jnp
from jax.experimental import pallas as pl
from jax.experimental.pallas import tpu as pltpu

IN_FEATURES = 28 * 28          # 784 (unpadded: full-dim block on the contraction axis)
HIDDEN = 512
OUT_FEATURES = 10
N_PAD = 128                    # padded output lanes for unmasked stores
DROPOUT_P = 0.2
KEEP_SCALE = 1.0 / (1.0 - DROPOUT_P)
KEEP_THRESHOLD = int(round((1.0 - DROPOUT_P) * (1 << 32)))   # uint32 compare threshold
TB_MAX = 512                   # max batch tile (rows per grid step)


def _round_up(v, m):
    return (v + m - 1) // m * m


def _mlp_kernel(seed_ref, x_ref, w1_ref, b1_ref, w2_ref, b2_ref, o_ref):
    # ---- Linear 1: bf16 MXU feed, f32 accumulation.  W1/b1 carry the folded 1.25
    #      dropout scale, so dropout below is a pure select (no per-element mul). ----
    x = x_ref[...].astype(jnp.bfloat16)
    h = jnp.dot(x, w1_ref[...], preferred_element_type=jnp.float32)
    h = h + b1_ref[...]                       # (TB, 512) + (1, 512)

    # ---- ReLU (VPU) ----
    h = jnp.maximum(h, 0.0)

    # ---- Dropout p=0.2: counter-based integer hash -> uint32 threshold compare ----
    tb, hidden = h.shape
    rows = jax.lax.broadcasted_iota(jnp.uint32, (tb, hidden), 0)
    cols = jax.lax.broadcasted_iota(jnp.uint32, (tb, hidden), 1)
    tile = pl.program_id(0).astype(jnp.uint32)
    seed = seed_ref[0].astype(jnp.uint32)
    idx = (tile * jnp.uint32(tb) + rows) * jnp.uint32(hidden) + cols
    z = (idx + seed * jnp.uint32(0x9E3779B9)) * jnp.uint32(0x85EBCA6B)
    z = z ^ (z >> jnp.uint32(16))
    z = z * jnp.uint32(0xC2B2AE35)
    z = z ^ (z >> jnp.uint32(13))
    keep = z < jnp.uint32(KEEP_THRESHOLD)
    h = jnp.where(keep, h, 0.0)

    # ---- Linear 2 (bf16 MXU, N padded to 128) + bias ----
    y = jnp.dot(h.astype(jnp.bfloat16), w2_ref[...],
                preferred_element_type=jnp.float32)
    y = y + b2_ref[...]                       # (TB, 128) + (1, 128)

    # ---- Sigmoid (EUP exp) ----
    y = jax.nn.sigmoid(y)

    # ---- round to 4 decimals (round-half-to-even, matches torch.round) ----
    o_ref[...] = jnp.round(y * 1.0e4) * 1.0e-4


def _compiler_params():
    if jax.default_backend() == "tpu":
        return pltpu.CompilerParams(dimension_semantics=("parallel",))
    return None


@jax.jit
def mlp_forward(x, w1, b1, w2p, b2p, seed):
    """x: (B, 784) f32; w1: (784, 512) bf16 (pre-scaled); b1: (1, 512) f32 (pre-scaled);
    w2p: (512, 128) bf16; b2p: (1, 128) f32; seed: (1,) int32."""
    B = x.shape[0]
    # Multiple of 8, capped at TB_MAX; chosen so B > 8 yields >= 2 grid steps
    # (keeps both v7x TensorCores busy via the "parallel" batch axis).
    tb = min(TB_MAX, max(8, _round_up(pl.cdiv(B, 2), 8)))
    grid = (pl.cdiv(B, tb),)

    out = pl.pallas_call(
        _mlp_kernel,
        out_shape=jax.ShapeDtypeStruct((B, N_PAD), jnp.float32),
        grid=grid,
        in_specs=[
            pl.BlockSpec(memory_space=pltpu.SMEM),                    # seed scalar
            pl.BlockSpec((tb, IN_FEATURES), lambda i: (i, 0)),        # x tile (no pad/copy)
            pl.BlockSpec((IN_FEATURES, HIDDEN), lambda i: (0, 0)),    # W1 (VMEM-resident)
            pl.BlockSpec((1, HIDDEN), lambda i: (0, 0)),              # b1 (resident)
            pl.BlockSpec((HIDDEN, N_PAD), lambda i: (0, 0)),          # W2 (resident)
            pl.BlockSpec((1, N_PAD), lambda i: (0, 0)),               # b2 (resident)
        ],
        out_specs=pl.BlockSpec((tb, N_PAD), lambda i: (i, 0)),        # lane-dense output
        compiler_params=_compiler_params(),
    )(seed, x, w1, b1, w2p, b2p)

    return out[:, :OUT_FEATURES]


def init_params(key):
    """Init mirroring torch.nn.Linear default U(-1/sqrt(fan_in), 1/sqrt(fan_in)),
    stored pre-transposed (in, out).  W1/b1 carry the folded dropout scale (1.25);
    W1/W2 are bf16 for single-pass MXU; W2/b2 are zero-padded 10 -> 128 lanes."""
    k1, k2, k3, k4 = jax.random.split(key, 4)
    bound1 = 1.0 / (IN_FEATURES ** 0.5)
    bound2 = 1.0 / (HIDDEN ** 0.5)
    w1 = jax.random.uniform(k1, (IN_FEATURES, HIDDEN), jnp.float32, -bound1, bound1)
    b1 = jax.random.uniform(k2, (1, HIDDEN), jnp.float32, -bound1, bound1)
    w2 = jax.random.uniform(k3, (HIDDEN, OUT_FEATURES), jnp.float32, -bound2, bound2)
    b2 = jax.random.uniform(k4, (1, OUT_FEATURES), jnp.float32, -bound2, bound2)
    w1 = (w1 * jnp.float32(KEEP_SCALE)).astype(jnp.bfloat16)
    b1 = b1 * jnp.float32(KEEP_SCALE)
    w2p = jnp.pad(w2, ((0, 0), (0, N_PAD - OUT_FEATURES))).astype(jnp.bfloat16)
    b2p = jnp.pad(b2, ((0, 0), (0, N_PAD - OUT_FEATURES)))
    return w1, b1, w2p, b2p


if __name__ == "__main__":
    key = jax.random.PRNGKey(0)
    k_param, k_x = jax.random.split(key)

    B = 8
    x = jax.random.normal(k_x, (B, IN_FEATURES), dtype=jnp.float32)
    w1, b1, w2p, b2p = init_params(k_param)
    seed = jnp.array([0], dtype=jnp.int32)   # torch.manual_seed(0) analogue

    out = mlp_forward(x, w1, b1, w2p, b2p, seed)
    out = jax.block_until_ready(out)

    assert out.shape == (B, OUT_FEATURES)
    assert out.dtype == jnp.float32
    # outputs are sigmoid values rounded to 4 decimals -> within [0, 1]
    assert bool(jnp.all((out >= 0.0) & (out <= 1.0)))
    print("KERNEL_OK")
</pallas_src>

<mosaic_0001>
module attributes {stable_mosaic.version = 11 : i64} {
  func.func @_mlp_kernel(%arg0: i32, %arg1: memref<1xi32, #tpu.memory_space<smem>>, %arg2: memref<8x784xf32, #tpu.memory_space<vmem>>, %arg3: memref<784x512xbf16, #tpu.memory_space<vmem>>, %arg4: memref<1x512xf32, #tpu.memory_space<vmem>>, %arg5: memref<512x128xbf16, #tpu.memory_space<vmem>>, %arg6: memref<1x128xf32, #tpu.memory_space<vmem>>, %arg7: memref<8x128xf32, #tpu.memory_space<vmem>>) attributes {dimension_semantics = [#tpu.dimension_semantics<arbitrary>], iteration_bounds = array<i64: 1>, scalar_prefetch = 0 : i64, scratch_operands = 0 : i64, tpu.core_type = #tpu.core_type<tc>, window_params = [{transform_indices = @transform_0, window_bounds = array<i64: 1>}, {transform_indices = @transform_1, window_bounds = array<i64: 8, 784>}, {pipeline_mode = #tpu.pipeline_mode<synchronous>, transform_indices = @transform_2, window_bounds = array<i64: 784, 512>}, {pipeline_mode = #tpu.pipeline_mode<synchronous>, transform_indices = @transform_3, window_bounds = array<i64: 1, 512>}, {pipeline_mode = #tpu.pipeline_mode<synchronous>, transform_indices = @transform_4, window_bounds = array<i64: 512, 128>}, {pipeline_mode = #tpu.pipeline_mode<synchronous>, transform_indices = @transform_5, window_bounds = array<i64: 1, 128>}, {transform_indices = @transform_6, window_bounds = array<i64: 8, 128>}]} {
    %c0 = arith.constant 0 : index
    %c0_0 = arith.constant 0 : index
    %0 = vector.load %arg2[%c0, %c0_0] : memref<8x784xf32, #tpu.memory_space<vmem>>, vector<8x784xf32>
    %1 = arith.truncf %0 : vector<8x784xf32> to vector<8x784xbf16>
    %c0_1 = arith.constant 0 : index
    %c0_2 = arith.constant 0 : index
    %2 = vector.load %arg3[%c0_1, %c0_2] : memref<784x512xbf16, #tpu.memory_space<vmem>>, vector<784x512xbf16>
    %cst = arith.constant dense<0.000000e+00> : vector<8x512xf32>
    %3 = tpu.matmul %1, %2, %cst {dimension_numbers = #tpu.dot_dimension_numbers<[1], [0], [0], [1], [0, 0, 1, 1], [], []>} : vector<8x784xbf16>, vector<784x512xbf16>, vector<8x512xf32> -> vector<8x512xf32>
    %c0_3 = arith.constant 0 : index
    %c0_4 = arith.constant 0 : index
    %4 = vector.load %arg4[%c0_3, %c0_4] : memref<1x512xf32, #tpu.memory_space<vmem>>, vector<1x512xf32>
    %5 = vector.broadcast %4 : vector<1x512xf32> to vector<8x512xf32>
    %6 = arith.addf %3, %5 : vector<8x512xf32>
    %cst_5 = arith.constant 0.000000e+00 : f32
    %7 = vector.broadcast %cst_5 : f32 to vector<8x512xf32>
    %8 = arith.maximumf %6, %7 : vector<8x512xf32>
    %9 = tpu.iota {dimensions = array<i32: 0>} : vector<8x512xi32>
    %10 = tpu.iota {dimensions = array<i32: 1>} : vector<8x512xi32>
    %c0_6 = arith.constant 0 : index
    %11 = memref.load %arg1[%c0_6] : memref<1xi32, #tpu.memory_space<smem>>
    %c8_i32 = arith.constant 8 : i32
    %12 = arith.muli %arg0, %c8_i32 : i32
    %13 = vector.broadcast %12 : i32 to vector<8x512xi32>
    %14 = arith.addi %13, %9 : vector<8x512xi32>
    %c512_i32 = arith.constant 512 : i32
    %15 = vector.broadcast %c512_i32 : i32 to vector<8x512xi32>
    %16 = arith.muli %14, %15 : vector<8x512xi32>
    %17 = arith.addi %16, %10 : vector<8x512xi32>
    %c-1640531527_i32 = arith.constant -1640531527 : i32
    %18 = arith.muli %11, %c-1640531527_i32 : i32
    %19 = vector.broadcast %18 : i32 to vector<8x512xi32>
    %20 = arith.addi %17, %19 : vector<8x512xi32>
    %c-2048144789_i32 = arith.constant -2048144789 : i32
    %21 = vector.broadcast %c-2048144789_i32 : i32 to vector<8x512xi32>
    %22 = arith.muli %20, %21 : vector<8x512xi32>
    %c16_i32 = arith.constant 16 : i32
    %23 = vector.broadcast %c16_i32 : i32 to vector<8x512xi32>
    %24 = arith.shrui %22, %23 : vector<8x512xi32>
    %25 = arith.xori %22, %24 : vector<8x512xi32>
    %c-1028477387_i32 = arith.constant -1028477387 : i32
    %26 = vector.broadcast %c-1028477387_i32 : i32 to vector<8x512xi32>
    %27 = arith.muli %25, %26 : vector<8x512xi32>
    %c13_i32 = arith.constant 13 : i32
    %28 = vector.broadcast %c13_i32 : i32 to vector<8x512xi32>
    %29 = arith.shrui %27, %28 : vector<8x512xi32>
    %30 = arith.xori %27, %29 : vector<8x512xi32>
    %c-858993459_i32 = arith.constant -858993459 : i32
    %31 = vector.broadcast %c-858993459_i32 : i32 to vector<8x512xi32>
    %32 = arith.cmpi ult, %30, %31 : vector<8x512xi32>
    %cst_7 = arith.constant 0.000000e+00 : f32
    %33 = vector.broadcast %cst_7 : f32 to vector<8x512xf32>
    %34 = arith.select %32, %8, %33 : vector<8x512xi1>, vector<8x512xf32>
    %35 = arith.truncf %34 : vector<8x512xf32> to vector<8x512xbf16>
    %c0_8 = arith.constant 0 : index
    %c0_9 = arith.constant 0 : index
    %36 = vector.load %arg5[%c0_8, %c0_9] : memref<512x128xbf16, #tpu.memory_space<vmem>>, vector<512x128xbf16>
    %cst_10 = arith.constant dense<0.000000e+00> : vector<8x128xf32>
    %37 = tpu.matmul %35, %36, %cst_10 {dimension_numbers = #tpu.dot_dimension_numbers<[1], [0], [0], [1], [0, 0, 1, 1], [], []>} : vector<8x512xbf16>, vector<512x128xbf16>, vector<8x128xf32> -> vector<8x128xf32>
    %c0_11 = arith.constant 0 : index
    %c0_12 = arith.constant 0 : index
    %38 = vector.load %arg6[%c0_11, %c0_12] : memref<1x128xf32, #tpu.memory_space<vmem>>, vector<1x128xf32>
    %39 = vector.broadcast %38 : vector<1x128xf32> to vector<8x128xf32>
    %40 = arith.addf %37, %39 : vector<8x128xf32>
    %41 = arith.negf %40 : vector<8x128xf32>
    %42 = math.exp %41 : vector<8x128xf32>
    %cst_13 = arith.constant 1.000000e+00 : f32
    %43 = vector.broadcast %cst_13 : f32 to vector<8x128xf32>
    %44 = arith.addf %43, %42 : vector<8x128xf32>
    %45 = arith.divf %43, %44 : vector<8x128xf32>
    %cst_14 = arith.constant 1.000000e+04 : f32
    %46 = vector.broadcast %cst_14 : f32 to vector<8x128xf32>
    %47 = arith.mulf %45, %46 : vector<8x128xf32>
    %48 = math.roundeven %47 : vector<8x128xf32>
    %cst_15 = arith.constant 9.99999974E-5 : f32
    %49 = vector.broadcast %cst_15 : f32 to vector<8x128xf32>
    %50 = arith.mulf %48, %49 : vector<8x128xf32>
    %c0_16 = arith.constant 0 : index
    %c0_17 = arith.constant 0 : index
    %51 = vector.load %arg7[%c0_16, %c0_17] : memref<8x128xf32, #tpu.memory_space<vmem>>, vector<8x128xf32>
    tpu.vector_store %arg7[%c0_16, %c0_17], %50 {strides = array<i32>} : memref<8x128xf32, #tpu.memory_space<vmem>>, vector<8x128xf32>,
    return
  }
  func.func @transform_0(%arg0: i32) -> i32 {
    %c0_i32 = arith.constant 0 : i32
    %c0_i32_0 = arith.constant 0 : i32
    return %c0_i32 : i32
  }
  func.func @transform_1(%arg0: i32) -> (i32, i32) {
    %c0_i32 = arith.constant 0 : i32
    %c0_i32_0 = arith.constant 0 : i32
    return %arg0, %c0_i32 : i32, i32
  }
  func.func @transform_2(%arg0: i32) -> (i32, i32) {
    %c0_i32 = arith.constant 0 : i32
    %c0_i32_0 = arith.constant 0 : i32
    %c0_i32_1 = arith.constant 0 : i32
    return %c0_i32, %c0_i32_0 : i32, i32
  }
  func.func @transform_3(%arg0: i32) -> (i32, i32) {
    %c0_i32 = arith.constant 0 : i32
    %c0_i32_0 = arith.constant 0 : i32
    %c0_i32_1 = arith.constant 0 : i32
    return %c0_i32, %c0_i32_0 : i32, i32
  }
  func.func @transform_4(%arg0: i32) -> (i32, i32) {
    %c0_i32 = arith.constant 0 : i32
    %c0_i32_0 = arith.constant 0 : i32
    %c0_i32_1 = arith.constant 0 : i32
    return %c0_i32, %c0_i32_0 : i32, i32
  }
  func.func @transform_5(%arg0: i32) -> (i32, i32) {
    %c0_i32 = arith.constant 0 : i32
    %c0_i32_0 = arith.constant 0 : i32
    %c0_i32_1 = arith.constant 0 : i32
    return %c0_i32, %c0_i32_0 : i32, i32
  }
  func.func @transform_6(%arg0: i32) -> (i32, i32) {
    %c0_i32 = arith.constant 0 : i32
    %c0_i32_0 = arith.constant 0 : i32
    return %arg0, %c0_i32 : i32, i32
  }
}

</mosaic_0001>

<llo_original>
// kernel: mlp_forward.1
$region0: #{mlp_forward.1}
  #allocation0 [shape = 'u32[]', space=smem, size = 0x4, offset = 0x4, fixed_abs, tag = 'smem constant byte address 0x4 - core index']
  #allocation1 [shape = 'u32[144,128]{1,0:T(1,128)}', space=vmem, size = 0x12000, scoped, tag = 'internal scratch']
  #allocation2 [shape = 's32[1]{0:T(128)S(6)}', space=smem, size = 0x200, scoped, tag = 'scoped memory for mlp_forward.1']
  %s0 = inlined_call_operand.<no memory space> [shape: s32[1], index: 0, kind: input, shape index: {}]
  %s1 = inlined_call_operand.hbm [shape: f32[8,784], index: 1, kind: input, shape index: {}]
  %s2 = inlined_call_operand.hbm [shape: bf16[784,512], index: 2, kind: input, shape index: {}]
  %s3 = inlined_call_operand.vmem [shape: f32[1,512], index: 3, kind: input, shape index: {}]
  %s4 = inlined_call_operand.hbm [shape: bf16[512,128], index: 4, kind: input, shape index: {}]
  %s5 = inlined_call_operand.vmem [shape: f32[1,128], index: 5, kind: input, shape index: {}]
  %s6 = inlined_call_operand.hbm [shape: f32[8,128], index: 6, kind: output, shape index: {}]
  %s7 = sld [smem:[#allocation0]]
  $region46: #{mlp_forward.1} parent=0
    _
  %s9 = ssub.s32 1, %s7
  %s10 = scalar_select 0, %s9, %s7
  %11 = sst [smem:[#allocation2]] %s0
  $region1: #{mlp_forward.1} parent=0
    #allocation3 [shape = 'u8[28672]{0}', space=vmem, size = 0x7000, scoped, tag = 'input window, operand 1, single buffered']
    #allocation4 [shape = 's32[1]{0}', space=sflag, size = 0x4, scoped, tag = 'scoped memory for mlp_forward.1']
    #allocation5 [shape = 's32[1]{0}', space=sflag, size = 0x4, scoped, tag = 'scoped memory for mlp_forward.1']
    #allocation6 [shape = 'u8[802816]{0}', space=vmem, size = 0xc4000, scoped, tag = 'input window, operand 2, single buffered']
    #allocation7 [shape = 's32[1]{0}', space=sflag, size = 0x4, scoped, tag = 'scoped memory for mlp_forward.1']
    #allocation8 [shape = 'u8[131072]{0}', space=vmem, size = 0x20000, scoped, tag = 'input window, operand 4, single buffered']
    #allocation9 [shape = 'u8[4096]{0}', space=vmem, size = 0x1000, scoped, tag = 'output window, operand 0, single buffered']
    %12 = vsyncpa [#allocation4], 0
    %13 = vsyncpa [#allocation7], 0
    %14 = vsyncpa [#allocation5], 0
    // Predicated region
    $region2: #{mlp_forward.1} parent=1 // pred_check
      _
    $region3: #{mlp_forward.1} parent=1 // pred_check_branch
      %16 = sbr.rel (0) target = $region5
    $region4: #{mlp_forward.1} parent=1 // pred_region
      _
    $region5: #{mlp_forward.1} parent=1 // pred_fallthru
      _
    // Predicated region
    $region6: #{mlp_forward.1} parent=1 // pred_check
      _
    $region7: #{mlp_forward.1} parent=1 // pred_check_branch
      %18 = sbr.rel (0) target = $region9
    $region8: #{mlp_forward.1} parent=1 // pred_region
      %s20 = ssub.s32 896, 896
      %21 = vsyncadd [#allocation4], %s20
      %s23 = sshll.u32 [#allocation3], 4
      %s24 = int_to_ptr.vmem [resolvable:$true] %s23
      %26 = dma.hbm_to_vmem [thread:$0]  %s1, 896, %s24, [#allocation4]
    $region9: #{mlp_forward.1} parent=1 // pred_fallthru
      _
    // Predicated region
    $region10: #{mlp_forward.1} parent=1 // pred_check
      _
    $region11: #{mlp_forward.1} parent=1 // pred_check_branch
      %28 = sbr.rel (0) target = $region13
    $region12: #{mlp_forward.1} parent=1 // pred_region
      %s30 = ssub.s32 25088, 25088
      %31 = vsyncadd [#allocation7], %s30
      %s32 = sshll.u32 [#allocation6], 4
      %s33 = int_to_ptr.vmem [resolvable:$true] %s32
      %38 = dma.hbm_to_vmem [thread:$0]  %s2, 25088, %s33, [#allocation7], 256, 256, 16
    $region13: #{mlp_forward.1} parent=1 // pred_fallthru
      _
    // Predicated region
    $region14: #{mlp_forward.1} parent=1 // pred_check
      _
    $region15: #{mlp_forward.1} parent=1 // pred_check_branch
      %40 = sbr.rel (0) target = $region17
    $region16: #{mlp_forward.1} parent=1 // pred_region
      _
    $region17: #{mlp_forward.1} parent=1 // pred_fallthru
      _
    // Predicated region
    $region18: #{mlp_forward.1} parent=1 // pred_check
      _
    $region19: #{mlp_forward.1} parent=1 // pred_check_branch
      %42 = sbr.rel (0) target = $region21
    $region20: #{mlp_forward.1} parent=1 // pred_region
      %s44 = ssub.s32 4096, 4096
      %45 = vsyncadd [#allocation7], %s44
      %s46 = sshll.u32 [#allocation8], 4
      %s47 = int_to_ptr.vmem [resolvable:$true] %s46
      %52 = dma.hbm_to_vmem [thread:$0]  %s4, 4096, %s47, [#allocation7], 64, 64, 4
    $region21: #{mlp_forward.1} parent=1 // pred_fallthru
      _
    // Predicated region
    $region22: #{mlp_forward.1} parent=1 // pred_check
      _
    $region23: #{mlp_forward.1} parent=1 // pred_check_branch
      %54 = sbr.rel (0) target = $region25
    $region24: #{mlp_forward.1} parent=1 // pred_region
      _
    $region25: #{mlp_forward.1} parent=1 // pred_fallthru
      _
    // Predicated region
    $region26: #{mlp_forward.1} parent=1 // pred_check
      _
    $region27: #{mlp_forward.1} parent=1 // pred_check_branch
      %56 = sbr.rel (0) target = $region29
    $region28: #{mlp_forward.1} parent=1 // pred_region
      %57 = dma.done [#allocation4], 896
    $region29: #{mlp_forward.1} parent=1 // pred_fallthru
      _
    // Predicated region
    $region30: #{mlp_forward.1} parent=1 // pred_check
      _
    $region31: #{mlp_forward.1} parent=1 // pred_check_branch
      %59 = sbr.rel (0) target = $region33
    $region32: #{mlp_forward.1} parent=1 // pred_region
      %60 = dma.done [#allocation7], 25088
    $region33: #{mlp_forward.1} parent=1 // pred_fallthru
      _
    // Predicated region
    $region34: #{mlp_forward.1} parent=1 // pred_check
      _
    $region35: #{mlp_forward.1} parent=1 // pred_check_branch
      %62 = sbr.rel (0) target = $region37
    $region36: #{mlp_forward.1} parent=1 // pred_region
      %63 = dma.done [#allocation7], 4096
    $region37: #{mlp_forward.1} parent=1 // pred_fallthru
      _
    %v65 = vld [vmem:[#allocation3] sm:$0xff]
    %v66 = vld [vmem:[#allocation3 + $0x8] sm:$0xff]
    %v67 = vld [vmem:[#allocation3 + $0x10] sm:$0xff]
    %v68 = vld [vmem:[#allocation3 + $0x18] sm:$0xff]
    %v69 = vld [vmem:[#allocation3 + $0x20] sm:$0xff]
    %v70 = vld [vmem:[#allocation3 + $0x28] sm:$0xff]
    %v71 = vld [vmem:[#allocation3 + $0x30] sm:$0xff]
    %v72 = vpack.c.bf16 %v65, %v65
    %v73 = vpack.c.bf16 %v66, %v66
    %v74 = vpack.c.bf16 %v67, %v67
    %v75 = vpack.c.bf16 %v68, %v68
    %v76 = vpack.c.bf16 %v69, %v69
    %v77 = vpack.c.bf16 %v70, %v70
    %v78 = vpack.c.bf16 %v71, %v71
    %v79 = vld [vmem:[#allocation6] sm:$0xff]
    %v80 = vld [vmem:[#allocation6 + $0x8] sm:$0xff]
    %v81 = vld [vmem:[#allocation6 + $0x10] sm:$0xff]
    %v82 = vld [vmem:[#allocation6 + $0x18] sm:$0xff]
    %v83 = vld [vmem:[#allocation6 + $0x20] sm:$0xff]
    %v84 = vld [vmem:[#allocation6 + $0x28] sm:$0xff]
    %v85 = vld [vmem:[#allocation6 + $0x30] sm:$0xff]
    %v86 = vld [vmem:[#allocation6 + $0x38] sm:$0xff]
    %v87 = vld [vmem:[#allocation6 + $0x40] sm:$0xff]
    %v88 = vld [vmem:[#allocation6 + $0x48] sm:$0xff]
    %v89 = vld [vmem:[#allocation6 + $0x50] sm:$0xff]
    %v90 = vld [vmem:[#allocation6 + $0x58] sm:$0xff]
    %v91 = vld [vmem:[#allocation6 + $0x60] sm:$0xff]
    %v92 = vld [vmem:[#allocation6 + $0x68] sm:$0xff]
    %v93 = vld [vmem:[#allocation6 + $0x70] sm:$0xff]
    %v94 = vld [vmem:[#allocation6 + $0x78] sm:$0xff]
    %v95 = vld [vmem:[#allocation6 + $0x80] sm:$0xff]
    %v96 = vld [vmem:[#allocation6 + $0x88] sm:$0xff]
    %v97 = vld [vmem:[#allocation6 + $0x90] sm:$0xff]
    %v98 = vld [vmem:[#allocation6 + $0x98] sm:$0xff]
    %v99 = vld [vmem:[#allocation6 + $0xa0] sm:$0xff]
    %v100 = vld [vmem:[#allocation6 + $0xa8] sm:$0xff]
    %v101 = vld [vmem:[#allocation6 + $0xb0] sm:$0xff]
    %v102 = vld [vmem:[#allocation6 + $0xb8] sm:$0xff]
    %v103 = vld [vmem:[#allocation6 + $0xc0] sm:$0xff]
    %v104 = vld [vmem:[#allocation6 + $0xc8] sm:$0xff]
    %v105 = vld [vmem:[#allocation6 + $0xd0] sm:$0xff]
    %v106 = vld [vmem:[#allocation6 + $0xd8] sm:$0xff]
    %v107 = vld [vmem:[#allocation6 + $0xe0] sm:$0xff]
    %v108 = vld [vmem:[#allocation6 + $0xe8] sm:$0xff]
    %v109 = vld [vmem:[#allocation6 + $0xf0] sm:$0xff]
    %v110 = vld [vmem:[#allocation6 + $0xf8] sm:$0xff]
    %v111 = vld [vmem:[#allocation6 + $0x100] sm:$0xff]
    %v112 = vld [vmem:[#allocation6 + $0x108] sm:$0xff]
    %v113 = vld [vmem:[#allocation6 + $0x110] sm:$0xff]
    %v114 = vld [vmem:[#allocation6 + $0x118] sm:$0xff]
    %v115 = vld [vmem:[#allocation6 + $0x120] sm:$0xff]
    %v116 = vld [vmem:[#allocation6 + $0x128] sm:$0xff]
    %v117 = vld [vmem:[#allocation6 + $0x130] sm:$0xff]
    %v118 = vld [vmem:[#allocation6 + $0x138] sm:$0xff]
    %v119 = vld [vmem:[#allocation6 + $0x140] sm:$0xff]
    %v120 = vld [vmem:[#allocation6 + $0x148] sm:$0xff]
    %v121 = vld [vmem:[#allocation6 + $0x150] sm:$0xff]
    %v122 = vld [vmem:[#allocation6 + $0x158] sm:$0xff]
    %v123 = vld [vmem:[#allocation6 + $0x160] sm:$0xff]
    %v124 = vld [vmem:[#allocation6 + $0x168] sm:$0xff]
    %v125 = vld [vmem:[#allocation6 + $0x170] sm:$0xff]
    %v126 = vld [vmem:[#allocation6 + $0x178] sm:$0xff]
    %v127 = vld [vmem:[#allocation6 + $0x180] sm:$0xff]
    %v128 = vld [vmem:[#allocation6 + $0x188] sm:$0xff]
    %v129 = vld [vmem:[#allocation6 + $0x190] sm:$0xff]
    %v130 = vld [vmem:[#allocation6 + $0x198] sm:$0xff]
    %v131 = vld [vmem:[#allocation6 + $0x1a0] sm:$0xff]
    %v132 = vld [vmem:[#allocation6 + $0x1a8] sm:$0xff]
    %v133 = vld [vmem:[#allocation6 + $0x1b0] sm:$0xff]
    %v134 = vld [vmem:[#allocation6 + $0x1b8] sm:$0xff]
    %v135 = vld [vmem:[#allocation6 + $0x1c0] sm:$0xff]
    %v136 = vld [vmem:[#allocation6 + $0x1c8] sm:$0xff]
    %v137 = vld [vmem:[#allocation6 + $0x1d0] sm:$0xff]
    %v138 = vld [vmem:[#allocation6 + $0x1d8] sm:$0xff]
    %v139 = vld [vmem:[#allocation6 + $0x1e0] sm:$0xff]
    %v140 = vld [vmem:[#allocation6 + $0x1e8] sm:$0xff]
    %v141 = vld [vmem:[#allocation6 + $0x1f0] sm:$0xff]
    %v142 = vld [vmem:[#allocation6 + $0x1f8] sm:$0xff]
    %v143 = vld [vmem:[#allocation6 + $0x200] sm:$0xff]
    %v144 = vld [vmem:[#allocation6 + $0x208] sm:$0xff]
    %v145 = vld [vmem:[#allocation6 + $0x210] sm:$0xff]
    %v146 = vld [vmem:[#allocation6 + $0x218] sm:$0xff]
    %v147 = vld [vmem:[#allocation6 + $0x220] sm:$0xff]
    %v148 = vld [vmem:[#allocation6 + $0x228] sm:$0xff]
    %v149 = vld [vmem:[#allocation6 + $0x230] sm:$0xff]
    %v150 = vld [vmem:[#allocation6 + $0x238] sm:$0xff]
    %v151 = vld [vmem:[#allocation6 + $0x240] sm:$0xff]
    %v152 = vld [vmem:[#allocation6 + $0x248] sm:$0xff]
    %v153 = vld [vmem:[#allocation6 + $0x250] sm:$0xff]
    %v154 = vld [vmem:[#allocation6 + $0x258] sm:$0xff]
    %v155 = vld [vmem:[#allocation6 + $0x260] sm:$0xff]
    %v156 = vld [vmem:[#allocation6 + $0x268] sm:$0xff]
    %v157 = vld [vmem:[#allocation6 + $0x270] sm:$0xff]
    %v158 = vld [vmem:[#allocation6 + $0x278] sm:$0xff]
    %v159 = vld [vmem:[#allocation6 + $0x280] sm:$0xff]
    %v160 = vld [vmem:[#allocation6 + $0x288] sm:$0xff]
    %v161 = vld [vmem:[#allocation6 + $0x290] sm:$0xff]
    %v162 = vld [vmem:[#allocation6 + $0x298] sm:$0xff]
    %v163 = vld [vmem:[#allocation6 + $0x2a0] sm:$0xff]
    %v164 = vld [vmem:[#allocation6 + $0x2a8] sm:$0xff]
    %v165 = vld [vmem:[#allocation6 + $0x2b0] sm:$0xff]
    %v166 = vld [vmem:[#allocation6 + $0x2b8] sm:$0xff]
    %v167 = vld [vmem:[#allocation6 + $0x2c0] sm:$0xff]
    %v168 = vld [vmem:[#allocation6 + $0x2c8] sm:$0xff]
    %v169 = vld [vmem:[#allocation6 + $0x2d0] sm:$0xff]
    %v170 = vld [vmem:[#allocation6 + $0x2d8] sm:$0xff]
    %v171 = vld [vmem:[#allocation6 + $0x2e0] sm:$0xff]
    %v172 = vld [vmem:[#allocation6 + $0x2e8] sm:$0xff]
    %v173 = vld [vmem:[#allocation6 + $0x2f0] sm:$0xff]
    %v174 = vld [vmem:[#allocation6 + $0x2f8] sm:$0xff]
    %v175 = vld [vmem:[#allocation6 + $0x300] sm:$0xff]
    %v176 = vld [vmem:[#allocation6 + $0x308] sm:$0xff]
    %v177 = vld [vmem:[#allocation6 + $0x310] sm:$0xff]
    %v178 = vld [vmem:[#allocation6 + $0x318] sm:$0xff]
    %v179 = vld [vmem:[#allocation6 + $0x320] sm:$0xff]
    %v180 = vld [vmem:[#allocation6 + $0x328] sm:$0xff]
    %v181 = vld [vmem:[#allocation6 + $0x330] sm:$0xff]
    %v182 = vld [vmem:[#allocation6 + $0x338] sm:$0xff]
    %v183 = vld [vmem:[#allocation6 + $0x340] sm:$0xff]
    %v184 = vld [vmem:[#allocation6 + $0x348] sm:$0xff]
    %v185 = vld [vmem:[#allocation6 + $0x350] sm:$0xff]
    %v186 = vld [vmem:[#allocation6 + $0x358] sm:$0xff]
    %v187 = vld [vmem:[#allocation6 + $0x360] sm:$0xff]
    %v188 = vld [vmem:[#allocation6 + $0x368] sm:$0xff]
    %v189 = vld [vmem:[#allocation6 + $0x370] sm:$0xff]
    %v190 = vld [vmem:[#allocation6 + $0x378] sm:$0xff]
    %v191 = vld [vmem:[#allocation6 + $0x380] sm:$0xff]
    %v192 = vld [vmem:[#allocation6 + $0x388] sm:$0xff]
    %v193 = vld [vmem:[#allocation6 + $0x390] sm:$0xff]
    %v194 = vld [vmem:[#allocation6 + $0x398] sm:$0xff]
    %v195 = vld [vmem:[#allocation6 + $0x3a0] sm:$0xff]
    %v196 = vld [vmem:[#allocation6 + $0x3a8] sm:$0xff]
    %v197 = vld [vmem:[#allocation6 + $0x3b0] sm:$0xff]
    %v198 = vld [vmem:[#allocation6 + $0x3b8] sm:$0xff]
    %v199 = vld [vmem:[#allocation6 + $0x3c0] sm:$0xff]
    %v200 = vld [vmem:[#allocation6 + $0x3c8] sm:$0xff]
    %v201 = vld [vmem:[#allocation6 + $0x3d0] sm:$0xff]
    %v202 = vld [vmem:[#allocation6 + $0x3d8] sm:$0xff]
    %v203 = vld [vmem:[#allocation6 + $0x3e0] sm:$0xff]
    %v204 = vld [vmem:[#allocation6 + $0x3e8] sm:$0xff]
    %v205 = vld [vmem:[#allocation6 + $0x3f0] sm:$0xff]
    %v206 = vld [vmem:[#allocation6 + $0x3f8] sm:$0xff]
    %v207 = vld [vmem:[#allocation6 + $0x400] sm:$0xff]
    %v208 = vld [vmem:[#allocation6 + $0x408] sm:$0xff]
    %v209 = vld [vmem:[#allocation6 + $0x410] sm:$0xff]
    %v210 = vld [vmem:[#allocation6 + $0x418] sm:$0xff]
    %v211 = vld [vmem:[#allocation6 + $0x420] sm:$0xff]
    %v212 = vld [vmem:[#allocation6 + $0x428] sm:$0xff]
    %v213 = vld [vmem:[#allocation6 + $0x430] sm:$0xff]
    %v214 = vld [vmem:[#allocation6 + $0x438] sm:$0xff]
    %v215 = vld [vmem:[#allocation6 + $0x440] sm:$0xff]
    %v216 = vld [vmem:[#allocation6 + $0x448] sm:$0xff]
    %v217 = vld [vmem:[#allocation6 + $0x450] sm:$0xff]
    %v218 = vld [vmem:[#allocation6 + $0x458] sm:$0xff]
    %v219 = vld [vmem:[#allocation6 + $0x460] sm:$0xff]
    %v220 = vld [vmem:[#allocation6 + $0x468] sm:$0xff]
    %v221 = vld [vmem:[#allocation6 + $0x470] sm:$0xff]
    %v222 = vld [vmem:[#allocation6 + $0x478] sm:$0xff]
    %v223 = vld [vmem:[#allocation6 + $0x480] sm:$0xff]
    %v224 = vld [vmem:[#allocation6 + $0x488] sm:$0xff]
    %v225 = vld [vmem:[#allocation6 + $0x490] sm:$0xff]
    %v226 = vld [vmem:[#allocation6 + $0x498] sm:$0xff]
    %v227 = vld [vmem:[#allocation6 + $0x4a0] sm:$0xff]
    %v228 = vld [vmem:[#allocation6 + $0x4a8] sm:$0xff]
    %v229 = vld [vmem:[#allocation6 + $0x4b0] sm:$0xff]
    %v230 = vld [vmem:[#allocation6 + $0x4b8] sm:$0xff]
    %v231 = vld [vmem:[#allocation6 + $0x4c0] sm:$0xff]
    %v232 = vld [vmem:[#allocation6 + $0x4c8] sm:$0xff]
    %v233 = vld [vmem:[#allocation6 + $0x4d0] sm:$0xff]
    %v234 = vld [vmem:[#allocation6 + $0x4d8] sm:$0xff]
    %v235 = vld [vmem:[#allocation6 + $0x4e0] sm:$0xff]
    %v236 = vld [vmem:[#allocation6 + $0x4e8] sm:$0xff]
    %v237 = vld [vmem:[#allocation6 + $0x4f0] sm:$0xff]
    %v238 = vld [vmem:[#allocation6 + $0x4f8] sm:$0xff]
    %v239 = vld [vmem:[#allocation6 + $0x500] sm:$0xff]
    %v240 = vld [vmem:[#allocation6 + $0x508] sm:$0xff]
    %v241 = vld [vmem:[#allocation6 + $0x510] sm:$0xff]
    %v242 = vld [vmem:[#allocation6 + $0x518] sm:$0xff]
    %v243 = vld [vmem:[#allocation6 + $0x520] sm:$0xff]
    %v244 = vld [vmem:[#allocation6 + $0x528] sm:$0xff]
    %v245 = vld [vmem:[#allocation6 + $0x530] sm:$0xff]
    %v246 = vld [vmem:[#allocation6 + $0x538] sm:$0xff]
    %v247 = vld [vmem:[#allocation6 + $0x540] sm:$0xff]
    %v248 = vld [vmem:[#allocation6 + $0x548] sm:$0xff]
    %v249 = vld [vmem:[#allocation6 + $0x550] sm:$0xff]
    %v250 = vld [vmem:[#allocation6 + $0x558] sm:$0xff]
    %v251 = vld [vmem:[#allocation6 + $0x560] sm:$0xff]
    %v252 = vld [vmem:[#allocation6 + $0x568] sm:$0xff]
    %v253 = vld [vmem:[#allocation6 + $0x570] sm:$0xff]
    %v254 = vld [vmem:[#allocation6 + $0x578] sm:$0xff]
    %v255 = vld [vmem:[#allocation6 + $0x580] sm:$0xff]
    %v256 = vld [vmem:[#allocation6 + $0x588] sm:$0xff]
    %v257 = vld [vmem:[#allocation6 + $0x590] sm:$0xff]
    %v258 = vld [vmem:[#allocation6 + $0x598] sm:$0xff]
    %v259 = vld [vmem:[#allocation6 + $0x5a0] sm:$0xff]
    %v260 = vld [vmem:[#allocation6 + $0x5a8] sm:$0xff]
    %v261 = vld [vmem:[#allocation6 + $0x5b0] sm:$0xff]
    %v262 = vld [vmem:[#allocation6 + $0x5b8] sm:$0xff]
    %v263 = vld [vmem:[#allocation6 + $0x5c0] sm:$0xff]
    %v264 = vld [vmem:[#allocation6 + $0x5c8] sm:$0xff]
    %v265 = vld [vmem:[#allocation6 + $0x5d0] sm:$0xff]
    %v266 = vld [vmem:[#allocation6 + $0x5d8] sm:$0xff]
    %v267 = vld [vmem:[#allocation6 + $0x5e0] sm:$0xff]
    %v268 = vld [vmem:[#allocation6 + $0x5e8] sm:$0xff]
    %v269 = vld [vmem:[#allocation6 + $0x5f0] sm:$0xff]
    %v270 = vld [vmem:[#allocation6 + $0x5f8] sm:$0xff]
    %v271 = vld [vmem:[#allocation6 + $0x600] sm:$0xff]
    %v272 = vld [vmem:[#allocation6 + $0x608] sm:$0xff]
    %v273 = vld [vmem:[#allocation6 + $0x610] sm:$0xff]
    %v274 = vld [vmem:[#allocation6 + $0x618] sm:$0xff]
    %v275 = vld [vmem:[%s3] sm:$0xf]
    %v277 = vlaneseq
    %v278 = vshrl.u32 %v277, 7
    %v279 = vsub.s32 0, %v278
    %v280 = vrot.slane %v275, %v279
    %v281 = vlaneseq
    %v282 = vshrl.u32 %v281, 7
    %v283 = vsub.s32 1, %v282
    %v284 = vrot.slane %v275, %v283
    %v285 = vlaneseq
    %v286 = vshrl.u32 %v285, 7
    %v287 = vsub.s32 2, %v286
    %v288 = vrot.slane %v275, %v287
    %v289 = vlaneseq
    %v290 = vshrl.u32 %v289, 7
    %v291 = vsub.s32 3, %v290
    %v292 = vrot.slane %v275, %v291
    %v493 = vunpack.c.l.b16 %v79
    %v494 = vunpack.c.h.b16 %v79
    %v495 = vunpack.c.l.b16 %v80
    %v496 = vunpack.c.h.b16 %v80
    %v497 = vunpack.c.l.b16 %v81
    %v498 = vunpack.c.h.b16 %v81
    %v499 = vunpack.c.l.b16 %v82
    %v500 = vunpack.c.h.b16 %v82
    %v501 = vunpack.c.l.b16 %v83
    %v502 = vunpack.c.h.b16 %v83
    %v503 = vunpack.c.l.b16 %v84
    %v504 = vunpack.c.h.b16 %v84
    %v505 = vunpack.c.l.b16 %v85
    %v506 = vunpack.c.h.b16 %v85
    %v507 = vunpack.c.l.b16 %v86
    %v508 = vunpack.c.h.b16 %v86
    %v509 = vunpack.c.l.b16 %v87
    %v510 = vunpack.c.h.b16 %v87
    %v511 = vunpack.c.l.b16 %v88
    %v512 = vunpack.c.h.b16 %v88
    %v513 = vunpack.c.l.b16 %v89
    %v514 = vunpack.c.h.b16 %v89
    %v515 = vunpack.c.l.b16 %v90
    %v516 = vunpack.c.h.b16 %v90
    %v517 = vunpack.c.l.b16 %v91
    %v518 = vunpack.c.h.b16 %v91
    %v519 = vunpack.c.l.b16 %v92
    %v520 = vunpack.c.h.b16 %v92
    %v521 = vunpack.c.l.b16 %v93
    %v522 = vunpack.c.h.b16 %v93
    %v523 = vunpack.c.l.b16 %v94
    %v524 = vunpack.c.h.b16 %v94
    %v525 = vunpack.c.l.b16 %v95
    %v526 = vunpack.c.h.b16 %v95
    %v527 = vunpack.c.l.b16 %v96
    %v528 = vunpack.c.h.b16 %v96
    %v529 = vunpack.c.l.b16 %v97
    %v530 = vunpack.c.h.b16 %v97
    %v531 = vunpack.c.l.b16 %v98
    %v532 = vunpack.c.h.b16 %v98
    %v533 = vunpack.c.l.b16 %v99
    %v534 = vunpack.c.h.b16 %v99
    %v535 = vunpack.c.l.b16 %v100
    %v536 = vunpack.c.h.b16 %v100
    %v537 = vunpack.c.l.b16 %v101
    %v538 = vunpack.c.h.b16 %v101
    %v539 = vunpack.c.l.b16 %v102
    %v540 = vunpack.c.h.b16 %v102
    %v541 = vunpack.c.l.b16 %v103
    %v542 = vunpack.c.h.b16 %v103
    %v543 = vunpack.c.l.b16 %v104
    %v544 = vunpack.c.h.b16 %v104
    %v545 = vunpack.c.l.b16 %v105
    %v546 = vunpack.c.h.b16 %v105
    %v547 = vunpack.c.l.b16 %v106
    %v548 = vunpack.c.h.b16 %v106
    %v549 = vunpack.c.l.b16 %v107
    %v550 = vunpack.c.h.b16 %v107
    %v551 = vunpack.c.l.b16 %v108
    %v552 = vunpack.c.h.b16 %v108
    %v553 = vunpack.c.l.b16 %v109
    %v554 = vunpack.c.h.b16 %v109
    %v555 = vunpack.c.l.b16 %v110
    %v556 = vunpack.c.h.b16 %v110
    %v557 = vunpack.c.l.b16 %v111
    %v558 = vunpack.c.h.b16 %v111
    %v559 = vunpack.c.l.b16 %v112
    %v560 = vunpack.c.h.b16 %v112
    %v561 = vunpack.c.l.b16 %v113
    %v562 = vunpack.c.h.b16 %v113
    %v563 = vunpack.c.l.b16 %v114
    %v564 = vunpack.c.h.b16 %v114
    %v565 = vunpack.c.l.b16 %v115
    %v566 = vunpack.c.h.b16 %v115
    %v567 = vunpack.c.l.b16 %v116
    %v568 = vunpack.c.h.b16 %v116
    %v569 = vunpack.c.l.b16 %v117
    %v570 = vunpack.c.h.b16 %v117
    %v571 = vunpack.c.l.b16 %v118
    %v572 = vunpack.c.h.b16 %v118
    %v573 = vunpack.c.l.b16 %v119
    %v574 = vunpack.c.h.b16 %v119
    %v575 = vunpack.c.l.b16 %v120
    %v576 = vunpack.c.h.b16 %v120
    %v577 = vunpack.c.l.b16 %v121
    %v578 = vunpack.c.h.b16 %v121
    %v579 = vunpack.c.l.b16 %v122
    %v580 = vunpack.c.h.b16 %v122
    %v581 = vunpack.c.l.b16 %v123
    %v582 = vunpack.c.h.b16 %v123
    %v583 = vunpack.c.l.b16 %v124
    %v584 = vunpack.c.h.b16 %v124
    %v585 = vunpack.c.l.b16 %v125
    %v586 = vunpack.c.h.b16 %v125
    %v587 = vunpack.c.l.b16 %v126
    %v588 = vunpack.c.h.b16 %v126
    %v589 = vunpack.c.l.b16 %v127
    %v590 = vunpack.c.h.b16 %v127
    %v591 = vunpack.c.l.b16 %v128
    %v592 = vunpack.c.h.b16 %v128
    %v593 = vunpack.c.l.b16 %v129
    %v594 = vunpack.c.h.b16 %v129
    %v595 = vunpack.c.l.b16 %v130
    %v596 = vunpack.c.h.b16 %v130
    %v597 = vunpack.c.l.b16 %v131
    %v598 = vunpack.c.h.b16 %v131
    %v599 = vunpack.c.l.b16 %v132
    %v600 = vunpack.c.h.b16 %v132
    %v601 = vunpack.c.l.b16 %v133
    %v602 = vunpack.c.h.b16 %v133
    %v603 = vunpack.c.l.b16 %v134
    %v604 = vunpack.c.h.b16 %v134
    %v605 = vunpack.c.l.b16 %v135
    %v606 = vunpack.c.h.b16 %v135
    %v607 = vunpack.c.l.b16 %v136
    %v608 = vunpack.c.h.b16 %v136
    %v609 = vunpack.c.l.b16 %v137
    %v610 = vunpack.c.h.b16 %v137
    %v611 = vunpack.c.l.b16 %v138
    %v612 = vunpack.c.h.b16 %v138
    %v613 = vunpack.c.l.b16 %v139
    %v614 = vunpack.c.h.b16 %v139
    %v615 = vunpack.c.l.b16 %v140
    %v616 = vunpack.c.h.b16 %v140
    %v617 = vunpack.c.l.b16 %v141
    %v618 = vunpack.c.h.b16 %v141
    %v619 = vunpack.c.l.b16 %v142
    %v620 = vunpack.c.h.b16 %v142
    %v621 = vunpack.c.l.b16 %v143
    %v622 = vunpack.c.h.b16 %v143
    %v623 = vunpack.c.l.b16 %v144
    %v624 = vunpack.c.h.b16 %v144
    %v625 = vunpack.c.l.b16 %v145
    %v626 = vunpack.c.h.b16 %v145
    %v627 = vunpack.c.l.b16 %v146
    %v628 = vunpack.c.h.b16 %v146
    %v629 = vunpack.c.l.b16 %v147
    %v630 = vunpack.c.h.b16 %v147
    %v631 = vunpack.c.l.b16 %v148
    %v632 = vunpack.c.h.b16 %v148
    %v633 = vunpack.c.l.b16 %v149
    %v634 = vunpack.c.h.b16 %v149
    %v635 = vunpack.c.l.b16 %v150
    %v636 = vunpack.c.h.b16 %v150
    %v637 = vunpack.c.l.b16 %v151
    %v638 = vunpack.c.h.b16 %v151
    %v639 = vunpack.c.l.b16 %v152
    %v640 = vunpack.c.h.b16 %v152
    %v641 = vunpack.c.l.b16 %v153
    %v642 = vunpack.c.h.b16 %v153
    %v643 = vunpack.c.l.b16 %v154
    %v644 = vunpack.c.h.b16 %v154
    %v645 = vunpack.c.l.b16 %v155
    %v646 = vunpack.c.h.b16 %v155
    %v647 = vunpack.c.l.b16 %v156
    %v648 = vunpack.c.h.b16 %v156
    %v649 = vunpack.c.l.b16 %v157
    %v650 = vunpack.c.h.b16 %v157
    %v651 = vunpack.c.l.b16 %v158
    %v652 = vunpack.c.h.b16 %v158
    %v653 = vunpack.c.l.b16 %v159
    %v654 = vunpack.c.h.b16 %v159
    %v655 = vunpack.c.l.b16 %v160
    %v656 = vunpack.c.h.b16 %v160
    %v657 = vunpack.c.l.b16 %v161
    %v658 = vunpack.c.h.b16 %v161
    %v659 = vunpack.c.l.b16 %v162
    %v660 = vunpack.c.h.b16 %v162
    %v661 = vunpack.c.l.b16 %v163
    %v662 = vunpack.c.h.b16 %v163
    %v663 = vunpack.c.l.b16 %v164
    %v664 = vunpack.c.h.b16 %v164
    %v665 = vunpack.c.l.b16 %v165
    %v666 = vunpack.c.h.b16 %v165
    %v667 = vunpack.c.l.b16 %v166
    %v668 = vunpack.c.h.b16 %v166
    %v669 = vunpack.c.l.b16 %v167
    %v670 = vunpack.c.h.b16 %v167
    %v671 = vunpack.c.l.b16 %v168
    %v672 = vunpack.c.h.b16 %v168
    %v673 = vunpack.c.l.b16 %v169
    %v674 = vunpack.c.h.b16 %v169
    %v675 = vunpack.c.l.b16 %v170
    %v676 = vunpack.c.h.b16 %v170
    %v677 = vunpack.c.l.b16 %v171
    %v678 = vunpack.c.h.b16 %v171
    %v679 = vunpack.c.l.b16 %v172
    %v680 = vunpack.c.h.b16 %v172
    %v681 = vunpack.c.l.b16 %v173
    %v682 = vunpack.c.h.b16 %v173
    %v683 = vunpack.c.l.b16 %v174
    %v684 = vunpack.c.h.b16 %v174
    %v685 = vunpack.c.l.b16 %v175
    %v686 = vunpack.c.h.b16 %v175
    %v687 = vunpack.c.l.b16 %v176
    %v688 = vunpack.c.h.b16 %v176
    %v689 = vunpack.c.l.b16 %v177
    %v690 = vunpack.c.h.b16 %v177
    %v691 = vunpack.c.l.b16 %v178
    %v692 = vunpack.c.h.b16 %v178
    %v693 = vunpack.c.l.b16 %v179
    %v694 = vunpack.c.h.b16 %v179
    %v695 = vunpack.c.l.b16 %v180
    %v696 = vunpack.c.h.b16 %v180
    %v697 = vunpack.c.l.b16 %v181
    %v698 = vunpack.c.h.b16 %v181
    %v699 = vunpack.c.l.b16 %v182
    %v700 = vunpack.c.h.b16 %v182
    %v701 = vunpack.c.l.b16 %v183
    %v702 = vunpack.c.h.b16 %v183
    %v703 = vunpack.c.l.b16 %v184
    %v704 = vunpack.c.h.b16 %v184
    %v705 = vunpack.c.l.b16 %v185
    %v706 = vunpack.c.h.b16 %v185
    %v707 = vunpack.c.l.b16 %v186
    %v708 = vunpack.c.h.b16 %v186
    %v709 = vunpack.c.l.b16 %v187
    %v710 = vunpack.c.h.b16 %v187
    %v711 = vunpack.c.l.b16 %v188
    %v712 = vunpack.c.h.b16 %v188
    %v713 = vunpack.c.l.b16 %v189
    %v714 = vunpack.c.h.b16 %v189
    %v715 = vunpack.c.l.b16 %v190
    %v716 = vunpack.c.h.b16 %v190
    %v717 = vunpack.c.l.b16 %v191
    %v718 = vunpack.c.h.b16 %v191
    %v719 = vunpack.c.l.b16 %v192
    %v720 = vunpack.c.h.b16 %v192
    %v721 = vunpack.c.l.b16 %v193
    %v722 = vunpack.c.h.b16 %v193
    %v723 = vunpack.c.l.b16 %v194
    %v724 = vunpack.c.h.b16 %v194
    %v725 = vunpack.c.l.b16 %v195
    %v726 = vunpack.c.h.b16 %v195
    %v727 = vunpack.c.l.b16 %v196
    %v728 = vunpack.c.h.b16 %v196
    %v729 = vunpack.c.l.b16 %v197
    %v730 = vunpack.c.h.b16 %v197
    %v731 = vunpack.c.l.b16 %v198
    %v732 = vunpack.c.h.b16 %v198
    %v733 = vunpack.c.l.b16 %v199
    %v734 = vunpack.c.h.b16 %v199
    %v735 = vunpack.c.l.b16 %v200
    %v736 = vunpack.c.h.b16 %v200
    %v737 = vunpack.c.l.b16 %v201
    %v738 = vunpack.c.h.b16 %v201
    %v739 = vunpack.c.l.b16 %v202
    %v740 = vunpack.c.h.b16 %v202
    %v741 = vunpack.c.l.b16 %v203
    %v742 = vunpack.c.h.b16 %v203
    %v743 = vunpack.c.l.b16 %v204
    %v744 = vunpack.c.h.b16 %v204
    %v745 = vunpack.c.l.b16 %v205
    %v746 = vunpack.c.h.b16 %v205
    %v747 = vunpack.c.l.b16 %v206
    %v748 = vunpack.c.h.b16 %v206
    %v749 = vunpack.c.l.b16 %v207
    %v750 = vunpack.c.h.b16 %v207
    %v751 = vunpack.c.l.b16 %v208
    %v752 = vunpack.c.h.b16 %v208
    %v753 = vunpack.c.l.b16 %v209
    %v754 = vunpack.c.h.b16 %v209
    %v755 = vunpack.c.l.b16 %v210
    %v756 = vunpack.c.h.b16 %v210
    %v757 = vunpack.c.l.b16 %v211
    %v758 = vunpack.c.h.b16 %v211
    %v759 = vunpack.c.l.b16 %v212
    %v760 = vunpack.c.h.b16 %v212
    %v761 = vunpack.c.l.b16 %v213
    %v762 = vunpack.c.h.b16 %v213
    %v763 = vunpack.c.l.b16 %v214
    %v764 = vunpack.c.h.b16 %v214
    %v765 = vunpack.c.l.b16 %v215
    %v766 = vunpack.c.h.b16 %v215
    %v767 = vunpack.c.l.b16 %v216
    %v768 = vunpack.c.h.b16 %v216
    %v769 = vunpack.c.l.b16 %v217
    %v770 = vunpack.c.h.b16 %v217
    %v771 = vunpack.c.l.b16 %v218
    %v772 = vunpack.c.h.b16 %v218
    %v773 = vunpack.c.l.b16 %v219
    %v774 = vunpack.c.h.b16 %v219
    %v775 = vunpack.c.l.b16 %v220
    %v776 = vunpack.c.h.b16 %v220
    %v777 = vunpack.c.l.b16 %v221
    %v778 = vunpack.c.h.b16 %v221
    %v779 = vunpack.c.l.b16 %v222
    %v780 = vunpack.c.h.b16 %v222
    %v781 = vunpack.c.l.b16 %v223
    %v782 = vunpack.c.h.b16 %v223
    %v783 = vunpack.c.l.b16 %v224
    %v784 = vunpack.c.h.b16 %v224
    %v785 = vunpack.c.l.b16 %v225
    %v786 = vunpack.c.h.b16 %v225
    %v787 = vunpack.c.l.b16 %v226
    %v788 = vunpack.c.h.b16 %v226
    %v789 = vunpack.c.l.b16 %v227
    %v790 = vunpack.c.h.b16 %v227
    %v791 = vunpack.c.l.b16 %v228
    %v792 = vunpack.c.h.b16 %v228
    %v793 = vunpack.c.l.b16 %v229
    %v794 = vunpack.c.h.b16 %v229
    %v795 = vunpack.c.l.b16 %v230
    %v796 = vunpack.c.h.b16 %v230
    %v797 = vunpack.c.l.b16 %v231
    %v798 = vunpack.c.h.b16 %v231
    %v799 = vunpack.c.l.b16 %v232
    %v800 = vunpack.c.h.b16 %v232
    %v801 = vunpack.c.l.b16 %v233
    %v802 = vunpack.c.h.b16 %v233
    %v803 = vunpack.c.l.b16 %v234
    %v804 = vunpack.c.h.b16 %v234
    %v805 = vunpack.c.l.b16 %v235
    %v806 = vunpack.c.h.b16 %v235
    %v807 = vunpack.c.l.b16 %v236
    %v808 = vunpack.c.h.b16 %v236
    %v809 = vunpack.c.l.b16 %v237
    %v810 = vunpack.c.h.b16 %v237
    %v811 = vunpack.c.l.b16 %v238
    %v812 = vunpack.c.h.b16 %v238
    %v813 = vunpack.c.l.b16 %v239
    %v814 = vunpack.c.h.b16 %v239
    %v815 = vunpack.c.l.b16 %v240
    %v816 = vunpack.c.h.b16 %v240
    %v817 = vunpack.c.l.b16 %v241
    %v818 = vunpack.c.h.b16 %v241
    %v819 = vunpack.c.l.b16 %v242
    %v820 = vunpack.c.h.b16 %v242
    %v821 = vunpack.c.l.b16 %v243
    %v822 = vunpack.c.h.b16 %v243
    %v823 = vunpack.c.l.b16 %v244
    %v824 = vunpack.c.h.b16 %v244
    %v825 = vunpack.c.l.b16 %v245
    %v826 = vunpack.c.h.b16 %v245
    %v827 = vunpack.c.l.b16 %v246
    %v828 = vunpack.c.h.b16 %v246
    %v829 = vunpack.c.l.b16 %v247
    %v830 = vunpack.c.h.b16 %v247
    %v831 = vunpack.c.l.b16 %v248
    %v832 = vunpack.c.h.b16 %v248
    %v833 = vunpack.c.l.b16 %v249
    %v834 = vunpack.c.h.b16 %v249
    %v835 = vunpack.c.l.b16 %v250
    %v836 = vunpack.c.h.b16 %v250
    %v837 = vunpack.c.l.b16 %v251
    %v838 = vunpack.c.h.b16 %v251
    %v839 = vunpack.c.l.b16 %v252
    %v840 = vunpack.c.h.b16 %v252
    %v841 = vunpack.c.l.b16 %v253
    %v842 = vunpack.c.h.b16 %v253
    %v843 = vunpack.c.l.b16 %v254
    %v844 = vunpack.c.h.b16 %v254
    %v845 = vunpack.c.l.b16 %v255
    %v846 = vunpack.c.h.b16 %v255
    %v847 = vunpack.c.l.b16 %v256
    %v848 = vunpack.c.h.b16 %v256
    %v849 = vunpack.c.l.b16 %v257
    %v850 = vunpack.c.h.b16 %v257
    %v851 = vunpack.c.l.b16 %v258
    %v852 = vunpack.c.h.b16 %v258
    %v853 = vunpack.c.l.b16 %v259
    %v854 = vunpack.c.h.b16 %v259
    %v855 = vunpack.c.l.b16 %v260
    %v856 = vunpack.c.h.b16 %v260
    %v857 = vunpack.c.l.b16 %v261
    %v858 = vunpack.c.h.b16 %v261
    %v859 = vunpack.c.l.b16 %v262
    %v860 = vunpack.c.h.b16 %v262
    %v861 = vunpack.c.l.b16 %v263
    %v862 = vunpack.c.h.b16 %v263
    %v863 = vunpack.c.l.b16 %v264
    %v864 = vunpack.c.h.b16 %v264
    %v865 = vunpack.c.l.b16 %v265
    %v866 = vunpack.c.h.b16 %v265
    %v867 = vunpack.c.l.b16 %v266
    %v868 = vunpack.c.h.b16 %v266
    %v869 = vunpack.c.l.b16 %v267
    %v870 = vunpack.c.h.b16 %v267
    %v871 = vunpack.c.l.b16 %v268
    %v872 = vunpack.c.h.b16 %v268
    %v873 = vunpack.c.l.b16 %v269
    %v874 = vunpack.c.h.b16 %v269
    %v875 = vunpack.c.l.b16 %v270
    %v876 = vunpack.c.h.b16 %v270
    %v877 = vunpack.c.l.b16 %v271
    %v878 = vunpack.c.h.b16 %v271
    %v879 = vunpack.c.l.b16 %v272
    %v880 = vunpack.c.h.b16 %v272
    %v881 = vunpack.c.l.b16 %v273
    %v882 = vunpack.c.h.b16 %v273
    %v883 = vunpack.c.l.b16 %v274
    %v884 = vunpack.c.h.b16 %v274
    %v885 = vpack.c.b16 %v497, %v493
    %v886 = vpack.c.b16 %v498, %v494
    %v887 = vpack.c.b16 %v499, %v495
    %v888 = vpack.c.b16 %v500, %v496
    %v889 = vpack.c.b16 %v505, %v501
    %v890 = vpack.c.b16 %v506, %v502
    %v891 = vpack.c.b16 %v507, %v503
    %v892 = vpack.c.b16 %v508, %v504
    %v893 = vpack.c.b16 %v513, %v509
    %v894 = vpack.c.b16 %v514, %v510
    %v895 = vpack.c.b16 %v515, %v511
    %v896 = vpack.c.b16 %v516, %v512
    %v897 = vpack.c.b16 %v521, %v517
    %v898 = vpack.c.b16 %v522, %v518
    %v899 = vpack.c.b16 %v523, %v519
    %v900 = vpack.c.b16 %v524, %v520
    %v901 = vpack.c.b16 %v529, %v525
    %v902 = vpack.c.b16 %v530, %v526
    %v903 = vpack.c.b16 %v531, %v527
    %v904 = vpack.c.b16 %v532, %v528
    %v905 = vpack.c.b16 %v537, %v533
    %v906 = vpack.c.b16 %v538, %v534
    %v907 = vpack.c.b16 %v539, %v535
    %v908 = vpack.c.b16 %v540, %v536
    %v909 = vpack.c.b16 %v545, %v541
    %v910 = vpack.c.b16 %v546, %v542
    %v911 = vpack.c.b16 %v547, %v543
    %v912 = vpack.c.b16 %v548, %v544
    %v913 = vpack.c.b16 %v553, %v549
    %v914 = vpack.c.b16 %v554, %v550
    %v915 = vpack.c.b16 %v555, %v551
    %v916 = vpack.c.b16 %v556, %v552
    %v917 = vpack.c.b16 %v561, %v557
    %v918 = vpack.c.b16 %v562, %v558
    %v919 = vpack.c.b16 %v563, %v559
    %v920 = vpack.c.b16 %v564, %v560
    %v921 = vpack.c.b16 %v569, %v565
    %v922 = vpack.c.b16 %v570, %v566
    %v923 = vpack.c.b16 %v571, %v567
    %v924 = vpack.c.b16 %v572, %v568
    %v925 = vpack.c.b16 %v577, %v573
    %v926 = vpack.c.b16 %v578, %v574
    %v927 = vpack.c.b16 %v579, %v575
    %v928 = vpack.c.b16 %v580, %v576
    %v929 = vpack.c.b16 %v585, %v581
    %v930 = vpack.c.b16 %v586, %v582
    %v931 = vpack.c.b16 %v587, %v583
    %v932 = vpack.c.b16 %v588, %v584
    %v933 = vpack.c.b16 %v593, %v589
    %v934 = vpack.c.b16 %v594, %v590
    %v935 = vpack.c.b16 %v595, %v591
    %v936 = vpack.c.b16 %v596, %v592
    %v937 = vpack.c.b16 %v601, %v597
    %v938 = vpack.c.b16 %v602, %v598
    %v939 = vpack.c.b16 %v603, %v599
    %v940 = vpack.c.b16 %v604, %v600
    %v941 = vpack.c.b16 %v609, %v605
    %v942 = vpack.c.b16 %v610, %v606
    %v943 = vpack.c.b16 %v611, %v607
    %v944 = vpack.c.b16 %v612, %v608
    %v945 = vpack.c.b16 %v617, %v613
    %v946 = vpack.c.b16 %v618, %v614
    %v947 = vpack.c.b16 %v619, %v615
    %v948 = vpack.c.b16 %v620, %v616
    %v949 = vpack.c.b16 %v625, %v621
    %v950 = vpack.c.b16 %v626, %v622
    %v951 = vpack.c.b16 %v627, %v623
    %v952 = vpack.c.b16 %v628, %v624
    %v953 = vpack.c.b16 %v633, %v629
    %v954 = vpack.c.b16 %v634, %v630
    %v955 = vpack.c.b16 %v635, %v631
    %v956 = vpack.c.b16 %v636, %v632
    %v957 = vpack.c.b16 %v641, %v637
    %v958 = vpack.c.b16 %v642, %v638
    %v959 = vpack.c.b16 %v643, %v639
    %v960 = vpack.c.b16 %v644, %v640
    %v961 = vpack.c.b16 %v649, %v645
    %v962 = vpack.c.b16 %v650, %v646
    %v963 = vpack.c.b16 %v651, %v647
    %v964 = vpack.c.b16 %v652, %v648
    %v965 = vpack.c.b16 %v657, %v653
    %v966 = vpack.c.b16 %v658, %v654
    %v967 = vpack.c.b16 %v659, %v655
    %v968 = vpack.c.b16 %v660, %v656
    %v969 = vpack.c.b16 %v665, %v661
    %v970 = vpack.c.b16 %v666, %v662
    %v971 = vpack.c.b16 %v667, %v663
    %v972 = vpack.c.b16 %v668, %v664
    %v973 = vpack.c.b16 %v673, %v669
    %v974 = vpack.c.b16 %v674, %v670
    %v975 = vpack.c.b16 %v675, %v671
    %v976 = vpack.c.b16 %v676, %v672
    %v977 = vpack.c.b16 %v681, %v677
    %v978 = vpack.c.b16 %v682, %v678
    %v979 = vpack.c.b16 %v683, %v679
    %v980 = vpack.c.b16 %v684, %v680
    %v981 = vpack.c.b16 %v689, %v685
    %v982 = vpack.c.b16 %v690, %v686
    %v983 = vpack.c.b16 %v691, %v687
    %v984 = vpack.c.b16 %v692, %v688
    %v985 = vpack.c.b16 %v697, %v693
    %v986 = vpack.c.b16 %v698, %v694
    %v987 = vpack.c.b16 %v699, %v695
    %v988 = vpack.c.b16 %v700, %v696
    %v989 = vpack.c.b16 %v705, %v701
    %v990 = vpack.c.b16 %v706, %v702
    %v991 = vpack.c.b16 %v707, %v703
    %v992 = vpack.c.b16 %v708, %v704
    %v993 = vpack.c.b16 %v713, %v709
    %v994 = vpack.c.b16 %v714, %v710
    %v995 = vpack.c.b16 %v715, %v711
    %v996 = vpack.c.b16 %v716, %v712
    %v997 = vpack.c.b16 %v721, %v717
    %v998 = vpack.c.b16 %v722, %v718
    %v999 = vpack.c.b16 %v723, %v719
    %v1000 = vpack.c.b16 %v724, %v720
    %v1001 = vpack.c.b16 %v729, %v725
    %v1002 = vpack.c.b16 %v730, %v726
    %v1003 = vpack.c.b16 %v731, %v727
    %v1004 = vpack.c.b16 %v732, %v728
    %v1005 = vpack.c.b16 %v737, %v733
    %v1006 = vpack.c.b16 %v738, %v734
    %v1007 = vpack.c.b16 %v739, %v735
    %v1008 = vpack.c.b16 %v740, %v736
    %v1009 = vpack.c.b16 %v745, %v741
    %v1010 = vpack.c.b16 %v746, %v742
    %v1011 = vpack.c.b16 %v747, %v743
    %v1012 = vpack.c.b16 %v748, %v744
    %v1013 = vpack.c.b16 %v753, %v749
    %v1014 = vpack.c.b16 %v754, %v750
    %v1015 = vpack.c.b16 %v755, %v751
    %v1016 = vpack.c.b16 %v756, %v752
    %v1017 = vpack.c.b16 %v761, %v757
    %v1018 = vpack.c.b16 %v762, %v758
    %v1019 = vpack.c.b16 %v763, %v759
    %v1020 = vpack.c.b16 %v764, %v760
    %v1021 = vpack.c.b16 %v769, %v765
    %v1022 = vpack.c.b16 %v770, %v766
    %v1023 = vpack.c.b16 %v771, %v767
    %v1024 = vpack.c.b16 %v772, %v768
    %v1025 = vpack.c.b16 %v777, %v773
    %v1026 = vpack.c.b16 %v778, %v774
    %v1027 = vpack.c.b16 %v779, %v775
    %v1028 = vpack.c.b16 %v780, %v776
    %v1029 = vpack.c.b16 %v785, %v781
    %v1030 = vpack.c.b16 %v786, %v782
    %v1031 = vpack.c.b16 %v787, %v783
    %v1032 = vpack.c.b16 %v788, %v784
    %v1033 = vpack.c.b16 %v793, %v789
    %v1034 = vpack.c.b16 %v794, %v790
    %v1035 = vpack.c.b16 %v795, %v791
    %v1036 = vpack.c.b16 %v796, %v792
    %v1037 = vpack.c.b16 %v801, %v797
    %v1038 = vpack.c.b16 %v802, %v798
    %v1039 = vpack.c.b16 %v803, %v799
    %v1040 = vpack.c.b16 %v804, %v800
    %v1041 = vpack.c.b16 %v809, %v805
    %v1042 = vpack.c.b16 %v810, %v806
    %v1043 = vpack.c.b16 %v811, %v807
    %v1044 = vpack.c.b16 %v812, %v808
    %v1045 = vpack.c.b16 %v817, %v813
    %v1046 = vpack.c.b16 %v818, %v814
    %v1047 = vpack.c.b16 %v819, %v815
    %v1048 = vpack.c.b16 %v820, %v816
    %v1049 = vpack.c.b16 %v825, %v821
    %v1050 = vpack.c.b16 %v826, %v822
    %v1051 = vpack.c.b16 %v827, %v823
    %v1052 = vpack.c.b16 %v828, %v824
    %v1053 = vpack.c.b16 %v833, %v829
    %v1054 = vpack.c.b16 %v834, %v830
    %v1055 = vpack.c.b16 %v835, %v831
    %v1056 = vpack.c.b16 %v836, %v832
    %v1057 = vpack.c.b16 %v841, %v837
    %v1058 = vpack.c.b16 %v842, %v838
    %v1059 = vpack.c.b16 %v843, %v839
    %v1060 = vpack.c.b16 %v844, %v840
    %v1061 = vpack.c.b16 %v849, %v845
    %v1062 = vpack.c.b16 %v850, %v846
    %v1063 = vpack.c.b16 %v851, %v847
    %v1064 = vpack.c.b16 %v852, %v848
    %v1065 = vpack.c.b16 %v857, %v853
    %v1066 = vpack.c.b16 %v858, %v854
    %v1067 = vpack.c.b16 %v859, %v855
    %v1068 = vpack.c.b16 %v860, %v856
    %v1069 = vpack.c.b16 %v865, %v861
    %v1070 = vpack.c.b16 %v866, %v862
    %v1071 = vpack.c.b16 %v867, %v863
    %v1072 = vpack.c.b16 %v868, %v864
    %v1073 = vpack.c.b16 %v873, %v869
    %v1074 = vpack.c.b16 %v874, %v870
    %v1075 = vpack.c.b16 %v875, %v871
    %v1076 = vpack.c.b16 %v876, %v872
    %v1077 = vpack.c.b16 %v881, %v877
    %v1078 = vpack.c.b16 %v882, %v878
    %v1079 = vpack.c.b16 %v883, %v879
    %v1080 = vpack.c.b16 %v884, %v880
    %vm1277 = vcmask 130048
    %v1279 = vsel %vm1277, %v78, 0
    %1281 = vmatprep.subr.bf16.mxu0 %v914
    %1282 = vmatpush1.bf16.msra.mxu0 %v913
    %1283 = vmatprep.subr.bf16.mxu0 %v910
    %1284 = vmatpush1.bf16.msra.mxu0 %v909
    %1285 = vmatprep.subr.bf16.mxu0 %v906
    %1286 = vmatpush1.bf16.msra.mxu0 %v905
    %1287 = vmatprep.subr.bf16.mxu0 %v902
    %1288 = vmatpush1.bf16.msra.mxu0 %v901
    %1289 = vmatprep.subr.bf16.mxu0 %v898
    %1290 = vmatpush1.bf16.msra.mxu0 %v897
    %1291 = vmatprep.subr.bf16.mxu0 %v894
    %1292 = vmatpush1.bf16.msra.mxu0 %v893
    %1293 = vmatprep.subr.bf16.mxu0 %v890
    %1294 = vmatpush1.bf16.msra.mxu0 %v889
    %1295 = vmatprep.subr.bf16.mxu0 %v886
    %1296 = vmatpush1.bf16.msra.mxu0 %v885
    %1297 = vmatprep.subr.bf16.mxu0 %v946
    %1298 = vmatpush2.bf16.msra.mxu0 %v945
    %1299 = vmatprep.subr.bf16.mxu0 %v942
    %1300 = vmatpush2.bf16.msra.mxu0 %v941
    %1301 = vmatprep.subr.bf16.mxu0 %v938
    %1302 = vmatpush2.bf16.msra.mxu0 %v937
    %1303 = vmatprep.subr.bf16.mxu0 %v934
    %1304 = vmatpush2.bf16.msra.mxu0 %v933
    %1305 = vmatprep.subr.bf16.mxu0 %v930
    %1306 = vmatpush2.bf16.msra.mxu0 %v929
    %1307 = vmatprep.subr.bf16.mxu0 %v926
    %1308 = vmatpush2.bf16.msra.mxu0 %v925
    %1309 = vmatprep.subr.bf16.mxu0 %v922
    %1310 = vmatpush2.bf16.msra.mxu0 %v921
    %1311 = vmatprep.subr.bf16.mxu0 %v918
    %1312 = vmatpush2.bf16.msra.mxu0 %v917
    %1313 = vmatprep.mubr.bf16.mxu0 %v73
    %1314 = vmatmul.mubr.bf16.gmra.mxu0 %v72
    %v1315 = vpop.f32.mrf.mxu0
    %v1316 = vadd.f32 %v280, %v1315
    %v1317 = vpop.f32.mrf.mxu0
    %v1318 = vadd.f32 %v284, %v1317
    %v1319 = vpop.f32.mrf.mxu0
    %v1320 = vpop.f32.mrf.mxu0
    %1321 = vdwg.mxu0
    %1322 = vmatprep.subr.bf16.mxu0 %v978
    %1323 = vmatpush1.bf16.msra.mxu0 %v977
    %1324 = vmatprep.subr.bf16.mxu0 %v974
    %1325 = vmatpush1.bf16.msra.mxu0 %v973
    %1326 = vmatprep.subr.bf16.mxu0 %v970
    %1327 = vmatpush1.bf16.msra.mxu0 %v969
    %1328 = vmatprep.subr.bf16.mxu0 %v966
    %1329 = vmatpush1.bf16.msra.mxu0 %v965
    %1330 = vmatprep.subr.bf16.mxu0 %v962
    %1331 = vmatpush1.bf16.msra.mxu0 %v961
    %1332 = vmatprep.subr.bf16.mxu0 %v958
    %1333 = vmatpush1.bf16.msra.mxu0 %v957
    %1334 = vmatprep.subr.bf16.mxu0 %v954
    %1335 = vmatpush1.bf16.msra.mxu0 %v953
    %1336 = vmatprep.subr.bf16.mxu0 %v950
    %1337 = vmatpush1.bf16.msra.mxu0 %v949
    %1338 = vmatprep.subr.bf16.mxu0 %v1010
    %1339 = vmatpush2.bf16.msra.mxu0 %v1009
    %1340 = vmatprep.subr.bf16.mxu0 %v1006
    %1341 = vmatpush2.bf16.msra.mxu0 %v1005
    %1342 = vmatprep.subr.bf16.mxu0 %v1002
    %1343 = vmatpush2.bf16.msra.mxu0 %v1001
    %1344 = vmatprep.subr.bf16.mxu0 %v998
    %1345 = vmatpush2.bf16.msra.mxu0 %v997
    %1346 = vmatprep.subr.bf16.mxu0 %v994
    %1347 = vmatpush2.bf16.msra.mxu0 %v993
    %1348 = vmatprep.subr.bf16.mxu0 %v990
    %1349 = vmatpush2.bf16.msra.mxu0 %v989
    %1350 = vmatprep.subr.bf16.mxu0 %v986
    %1351 = vmatpush2.bf16.msra.mxu0 %v985
    %1352 = vmatprep.subr.bf16.mxu0 %v982
    %1353 = vmatpush2.bf16.msra.mxu0 %v981
    %1354 = vmatprep.mubr.bf16.mxu0 %v75
    %1355 = vmatmul.mubr.bf16.gmra.mxu0 %v74
    %v1356 = vpop.f32.mrf.mxu0
    %v1357 = vadd.f32 %v1316, %v1356
    %v1358 = vpop.f32.mrf.mxu0
    %v1359 = vadd.f32 %v1318, %v1358
    %v1360 = vpop.f32.mrf.mxu0
    %v1361 = vpop.f32.mrf.mxu0
    %1362 = vdwg.mxu0
    %1363 = vmatprep.subr.bf16.mxu0 %v1042
    %1364 = vmatpush1.bf16.msra.mxu0 %v1041
    %1365 = vmatprep.subr.bf16.mxu0 %v1038
    %1366 = vmatpush1.bf16.msra.mxu0 %v1037
    %1367 = vmatprep.subr.bf16.mxu0 %v1034
    %1368 = vmatpush1.bf16.msra.mxu0 %v1033
    %1369 = vmatprep.subr.bf16.mxu0 %v1030
    %1370 = vmatpush1.bf16.msra.mxu0 %v1029
    %1371 = vmatprep.subr.bf16.mxu0 %v1026
    %1372 = vmatpush1.bf16.msra.mxu0 %v1025
    %1373 = vmatprep.subr.bf16.mxu0 %v1022
    %1374 = vmatpush1.bf16.msra.mxu0 %v1021
    %1375 = vmatprep.subr.bf16.mxu0 %v1018
    %1376 = vmatpush1.bf16.msra.mxu0 %v1017
    %1377 = vmatprep.subr.bf16.mxu0 %v1014
    %1378 = vmatpush1.bf16.msra.mxu0 %v1013
    %1379 = vmatprep.subr.bf16.mxu0 %v1074
    %1380 = vmatpush2.bf16.msra.mxu0 %v1073
    %1381 = vmatprep.subr.bf16.mxu0 %v1070
    %1382 = vmatpush2.bf16.msra.mxu0 %v1069
    %1383 = vmatprep.subr.bf16.mxu0 %v1066
    %1384 = vmatpush2.bf16.msra.mxu0 %v1065
    %1385 = vmatprep.subr.bf16.mxu0 %v1062
    %1386 = vmatpush2.bf16.msra.mxu0 %v1061
    %1387 = vmatprep.subr.bf16.mxu0 %v1058
    %1388 = vmatpush2.bf16.msra.mxu0 %v1057
    %1389 = vmatprep.subr.bf16.mxu0 %v1054
    %1390 = vmatpush2.bf16.msra.mxu0 %v1053
    %1391 = vmatprep.subr.bf16.mxu0 %v1050
    %1392 = vmatpush2.bf16.msra.mxu0 %v1049
    %1393 = vmatprep.subr.bf16.mxu0 %v1046
    %1394 = vmatpush2.bf16.msra.mxu0 %v1045
    %1395 = vmatprep.mubr.bf16.mxu0 %v77
    %1396 = vmatmul.mubr.bf16.gmra.mxu0 %v76
    %v1397 = vpop.f32.mrf.mxu0
    %v1398 = vadd.f32 %v1357, %v1397
    %v1399 = vpop.f32.mrf.mxu0
    %v1400 = vadd.f32 %v1359, %v1399
    %v1401 = vpop.f32.mrf.mxu0
    %v1402 = vpop.f32.mrf.mxu0
    %1403 = vdwg.mxu0
    %1404 = vmatprep.subr.bf16.mxu0 0
    %1405 = vmatpush1.bf16.msra.mxu0 0
    %1406 = vmatprep.subr.bf16.mxu0 0
    %1407 = vmatpush1.bf16.msra.mxu0 0
    %1408 = vmatprep.subr.bf16.mxu0 0
    %1409 = vmatpush1.bf16.msra.mxu0 0
    %1410 = vmatprep.subr.bf16.mxu0 0
    %1411 = vmatpush1.bf16.msra.mxu0 0
    %1412 = vmatprep.subr.bf16.mxu0 0
    %1413 = vmatpush1.bf16.msra.mxu0 0
    %1414 = vmatprep.subr.bf16.mxu0 0
    %1415 = vmatpush1.bf16.msra.mxu0 0
    %1416 = vmatprep.subr.bf16.mxu0 0
    %1417 = vmatpush1.bf16.msra.mxu0 0
    %1418 = vmatprep.subr.bf16.mxu0 %v1078
    %1419 = vmatpush1.bf16.msra.mxu0 %v1077
    %1420 = vmatprep.subr.bf16.mxu0 0
    %1421 = vmatpush2.bf16.msra.mxu0 0
    %1422 = vmatprep.subr.bf16.mxu0 0
    %1423 = vmatpush2.bf16.msra.mxu0 0
    %1424 = vmatprep.subr.bf16.mxu0 0
    %1425 = vmatpush2.bf16.msra.mxu0 0
    %1426 = vmatprep.subr.bf16.mxu0 0
    %1427 = vmatpush2.bf16.msra.mxu0 0
    %1428 = vmatprep.subr.bf16.mxu0 0
    %1429 = vmatpush2.bf16.msra.mxu0 0
    %1430 = vmatprep.subr.bf16.mxu0 0
    %1431 = vmatpush2.bf16.msra.mxu0 0
    %1432 = vmatprep.subr.bf16.mxu0 0
    %1433 = vmatpush2.bf16.msra.mxu0 0
    %1434 = vmatprep.subr.bf16.mxu0 0
    %1435 = vmatpush2.bf16.msra.mxu0 0
    %1436 = vmatprep.mubr.bf16.mxu0 0
    %1437 = vmatmul.mubr.bf16.gmra.mxu0 %v1279
    %v1438 = vpop.f32.mrf.mxu0
    %v1439 = vadd.f32 %v1398, %v1438
    %v1440 = vpop.f32.mrf.mxu0
    %v1441 = vadd.f32 %v1400, %v1440
    %v1442 = vpop.f32.mrf.mxu0
    %v1443 = vpop.f32.mrf.mxu0
    %1444 = vdwg.mxu0
    %1445 = vmatprep.subr.bf16.mxu0 %v916
    %1446 = vmatpush1.bf16.msra.mxu0 %v915
    %1447 = vmatprep.subr.bf16.mxu0 %v912
    %1448 = vmatpush1.bf16.msra.mxu0 %v911
    %1449 = vmatprep.subr.bf16.mxu0 %v908
    %1450 = vmatpush1.bf16.msra.mxu0 %v907
    %1451 = vmatprep.subr.bf16.mxu0 %v904
    %1452 = vmatpush1.bf16.msra.mxu0 %v903
    %1453 = vmatprep.subr.bf16.mxu0 %v900
    %1454 = vmatpush1.bf16.msra.mxu0 %v899
    %1455 = vmatprep.subr.bf16.mxu0 %v896
    %1456 = vmatpush1.bf16.msra.mxu0 %v895
    %1457 = vmatprep.subr.bf16.mxu0 %v892
    %1458 = vmatpush1.bf16.msra.mxu0 %v891
    %1459 = vmatprep.subr.bf16.mxu0 %v888
    %1460 = vmatpush1.bf16.msra.mxu0 %v887
    %1461 = vmatprep.subr.bf16.mxu0 %v948
    %1462 = vmatpush2.bf16.msra.mxu0 %v947
    %1463 = vmatprep.subr.bf16.mxu0 %v944
    %1464 = vmatpush2.bf16.msra.mxu0 %v943
    %1465 = vmatprep.subr.bf16.mxu0 %v940
    %1466 = vmatpush2.bf16.msra.mxu0 %v939
    %1467 = vmatprep.subr.bf16.mxu0 %v936
    %1468 = vmatpush2.bf16.msra.mxu0 %v935
    %1469 = vmatprep.subr.bf16.mxu0 %v932
    %1470 = vmatpush2.bf16.msra.mxu0 %v931
    %1471 = vmatprep.subr.bf16.mxu0 %v928
    %1472 = vmatpush2.bf16.msra.mxu0 %v927
    %1473 = vmatprep.subr.bf16.mxu0 %v924
    %1474 = vmatpush2.bf16.msra.mxu0 %v923
    %1475 = vmatprep.subr.bf16.mxu0 %v920
    %1476 = vmatpush2.bf16.msra.mxu0 %v919
    %1477 = vmatprep.mubr.bf16.mxu0 %v73
    %1478 = vmatmul.mubr.bf16.gmra.mxu0 %v72
    %v1479 = vpop.f32.mrf.mxu0
    %v1480 = vadd.f32 %v288, %v1479
    %v1481 = vpop.f32.mrf.mxu0
    %v1482 = vadd.f32 %v292, %v1481
    %v1483 = vpop.f32.mrf.mxu0
    %v1484 = vpop.f32.mrf.mxu0
    %1485 = vdwg.mxu0
    %1486 = vmatprep.subr.bf16.mxu0 %v980
    %1487 = vmatpush1.bf16.msra.mxu0 %v979
    %1488 = vmatprep.subr.bf16.mxu0 %v976
    %1489 = vmatpush1.bf16.msra.mxu0 %v975
    %1490 = vmatprep.subr.bf16.mxu0 %v972
    %1491 = vmatpush1.bf16.msra.mxu0 %v971
    %1492 = vmatprep.subr.bf16.mxu0 %v968
    %1493 = vmatpush1.bf16.msra.mxu0 %v967
    %1494 = vmatprep.subr.bf16.mxu0 %v964
    %1495 = vmatpush1.bf16.msra.mxu0 %v963
    %1496 = vmatprep.subr.bf16.mxu0 %v960
    %1497 = vmatpush1.bf16.msra.mxu0 %v959
    %1498 = vmatprep.subr.bf16.mxu0 %v956
    %1499 = vmatpush1.bf16.msra.mxu0 %v955
    %1500 = vmatprep.subr.bf16.mxu0 %v952
    %1501 = vmatpush1.bf16.msra.mxu0 %v951
    %1502 = vmatprep.subr.bf16.mxu0 %v1012
    %1503 = vmatpush2.bf16.msra.mxu0 %v1011
    %1504 = vmatprep.subr.bf16.mxu0 %v1008
    %1505 = vmatpush2.bf16.msra.mxu0 %v1007
    %1506 = vmatprep.subr.bf16.mxu0 %v1004
    %1507 = vmatpush2.bf16.msra.mxu0 %v1003
    %1508 = vmatprep.subr.bf16.mxu0 %v1000
    %1509 = vmatpush2.bf16.msra.mxu0 %v999
    %1510 = vmatprep.subr.bf16.mxu0 %v996
    %1511 = vmatpush2.bf16.msra.mxu0 %v995
    %1512 = vmatprep.subr.bf16.mxu0 %v992
    %1513 = vmatpush2.bf16.msra.mxu0 %v991
    %1514 = vmatprep.subr.bf16.mxu0 %v988
    %1515 = vmatpush2.bf16.msra.mxu0 %v987
    %1516 = vmatprep.subr.bf16.mxu0 %v984
    %1517 = vmatpush2.bf16.msra.mxu0 %v983
    %1518 = vmatprep.mubr.bf16.mxu0 %v75
    %1519 = vmatmul.mubr.bf16.gmra.mxu0 %v74
    %v1520 = vpop.f32.mrf.mxu0
    %v1521 = vadd.f32 %v1480, %v1520
    %v1522 = vpop.f32.mrf.mxu0
    %v1523 = vadd.f32 %v1482, %v1522
    %v1524 = vpop.f32.mrf.mxu0
    %v1525 = vpop.f32.mrf.mxu0
    %1526 = vdwg.mxu0
    %1527 = vmatprep.subr.bf16.mxu0 %v1044
    %1528 = vmatpush1.bf16.msra.mxu0 %v1043
    %1529 = vmatprep.subr.bf16.mxu0 %v1040
    %1530 = vmatpush1.bf16.msra.mxu0 %v1039
    %1531 = vmatprep.subr.bf16.mxu0 %v1036
    %1532 = vmatpush1.bf16.msra.mxu0 %v1035
    %1533 = vmatprep.subr.bf16.mxu0 %v1032
    %1534 = vmatpush1.bf16.msra.mxu0 %v1031
    %1535 = vmatprep.subr.bf16.mxu0 %v1028
    %1536 = vmatpush1.bf16.msra.mxu0 %v1027
    %1537 = vmatprep.subr.bf16.mxu0 %v1024
    %1538 = vmatpush1.bf16.msra.mxu0 %v1023
    %1539 = vmatprep.subr.bf16.mxu0 %v1020
    %1540 = vmatpush1.bf16.msra.mxu0 %v1019
    %1541 = vmatprep.subr.bf16.mxu0 %v1016
    %1542 = vmatpush1.bf16.msra.mxu0 %v1015
    %1543 = vmatprep.subr.bf16.mxu0 %v1076
    %1544 = vmatpush2.bf16.msra.mxu0 %v1075
    %1545 = vmatprep.subr.bf16.mxu0 %v1072
    %1546 = vmatpush2.bf16.msra.mxu0 %v1071
    %1547 = vmatprep.subr.bf16.mxu0 %v1068
    %1548 = vmatpush2.bf16.msra.mxu0 %v1067
    %1549 = vmatprep.subr.bf16.mxu0 %v1064
    %1550 = vmatpush2.bf16.msra.mxu0 %v1063
    %1551 = vmatprep.subr.bf16.mxu0 %v1060
    %1552 = vmatpush2.bf16.msra.mxu0 %v1059
    %1553 = vmatprep.subr.bf16.mxu0 %v1056
    %1554 = vmatpush2.bf16.msra.mxu0 %v1055
    %1555 = vmatprep.subr.bf16.mxu0 %v1052
    %1556 = vmatpush2.bf16.msra.mxu0 %v1051
    %1557 = vmatprep.subr.bf16.mxu0 %v1048
    %1558 = vmatpush2.bf16.msra.mxu0 %v1047
    %1559 = vmatprep.mubr.bf16.mxu0 %v77
    %1560 = vmatmul.mubr.bf16.gmra.mxu0 %v76
    %v1561 = vpop.f32.mrf.mxu0
    %v1562 = vadd.f32 %v1521, %v1561
    %v1563 = vpop.f32.mrf.mxu0
    %v1564 = vadd.f32 %v1523, %v1563
    %v1565 = vpop.f32.mrf.mxu0
    %v1566 = vpop.f32.mrf.mxu0
    %1567 = vdwg.mxu0
    %1568 = vmatprep.subr.bf16.mxu0 0
    %1569 = vmatpush1.bf16.msra.mxu0 0
    %1570 = vmatprep.subr.bf16.mxu0 0
    %1571 = vmatpush1.bf16.msra.mxu0 0
    %1572 = vmatprep.subr.bf16.mxu0 0
    %1573 = vmatpush1.bf16.msra.mxu0 0
    %1574 = vmatprep.subr.bf16.mxu0 0
    %1575 = vmatpush1.bf16.msra.mxu0 0
    %1576 = vmatprep.subr.bf16.mxu0 0
    %1577 = vmatpush1.bf16.msra.mxu0 0
    %1578 = vmatprep.subr.bf16.mxu0 0
    %1579 = vmatpush1.bf16.msra.mxu0 0
    %1580 = vmatprep.subr.bf16.mxu0 0
    %1581 = vmatpush1.bf16.msra.mxu0 0
    %1582 = vmatprep.subr.bf16.mxu0 %v1080
    %1583 = vmatpush1.bf16.msra.mxu0 %v1079
    %1584 = vmatprep.subr.bf16.mxu0 0
    %1585 = vmatpush2.bf16.msra.mxu0 0
    %1586 = vmatprep.subr.bf16.mxu0 0
    %1587 = vmatpush2.bf16.msra.mxu0 0
    %1588 = vmatprep.subr.bf16.mxu0 0
    %1589 = vmatpush2.bf16.msra.mxu0 0
    %1590 = vmatprep.subr.bf16.mxu0 0
    %1591 = vmatpush2.bf16.msra.mxu0 0
    %1592 = vmatprep.subr.bf16.mxu0 0
    %1593 = vmatpush2.bf16.msra.mxu0 0
    %1594 = vmatprep.subr.bf16.mxu0 0
    %1595 = vmatpush2.bf16.msra.mxu0 0
    %1596 = vmatprep.subr.bf16.mxu0 0
    %1597 = vmatpush2.bf16.msra.mxu0 0
    %1598 = vmatprep.subr.bf16.mxu0 0
    %1599 = vmatpush2.bf16.msra.mxu0 0
    %1600 = vmatprep.mubr.bf16.mxu0 0
    %1601 = vmatmul.mubr.bf16.gmra.mxu0 %v1279
    %v1602 = vpop.f32.mrf.mxu0
    %v1603 = vadd.f32 %v1562, %v1602
    %v1604 = vpop.f32.mrf.mxu0
    %v1605 = vadd.f32 %v1564, %v1604
    %v1606 = vpop.f32.mrf.mxu0
    %v1607 = vpop.f32.mrf.mxu0
    %1608 = vdwg.mxu0
    %v1609 = vmax.f32 %v1439, 0.0
    %v1610 = vmax.f32 %v1441, 0.0
    %v1611 = vmax.f32 %v1603, 0.0
    %v1612 = vmax.f32 %v1605, 0.0
    %v1613 = vlaneseq
    %v1614 = vshrl.u32 %v1613, 7
    %v1615 = vlaneseq
    %v1616 = vand.u32 %v1615, 127
    %v1617 = vadd.s32 %v1616, 128
    %v1618 = vadd.s32 %v1616, 256
    %v1619 = vadd.s32 %v1616, 384
    %s1620 = sld [smem:[#allocation2]]
    %s1621 = smul.u32 0, 8
    %v1622 = vstv %s1621
    %v1623 = vadd.s32 %v1622, %v1614
    %v1624 = vmul.u32 %v1623, 512
    %v1625 = vadd.s32 %v1624, %v1616
    %v1626 = vadd.s32 %v1624, %v1617
    %v1627 = vadd.s32 %v1624, %v1618
    %v1628 = vadd.s32 %v1624, %v1619
    %s1629 = smul.u32 %s1620, 2654435769
    %v1630 = vstv %s1629
    %v1631 = vadd.s32 %v1625, %v1630
    %v1632 = vadd.s32 %v1626, %v1630
    %v1633 = vadd.s32 %v1627, %v1630
    %v1634 = vadd.s32 %v1628, %v1630
    %v1635 = vmul.u32 %v1631, 2246822507
    %v1636 = vmul.u32 %v1632, 2246822507
    %v1637 = vmul.u32 %v1633, 2246822507
    %v1638 = vmul.u32 %v1634, 2246822507
    %v1639 = vshrl.u32 %v1635, 16
    %v1640 = vshrl.u32 %v1636, 16
    %v1641 = vshrl.u32 %v1637, 16
    %v1642 = vshrl.u32 %v1638, 16
    %v1643 = vxor.u32 %v1635, %v1639
    %v1644 = vxor.u32 %v1636, %v1640
    %v1645 = vxor.u32 %v1637, %v1641
    %v1646 = vxor.u32 %v1638, %v1642
    %v1647 = vmul.u32 %v1643, 3266489909
    %v1648 = vmul.u32 %v1644, 3266489909
    %v1649 = vmul.u32 %v1645, 3266489909
    %v1650 = vmul.u32 %v1646, 3266489909
    %v1651 = vshrl.u32 %v1647, 13
    %v1652 = vshrl.u32 %v1648, 13
    %v1653 = vshrl.u32 %v1649, 13
    %v1654 = vshrl.u32 %v1650, 13
    %v1655 = vxor.u32 %v1647, %v1651
    %v1656 = vxor.u32 %v1648, %v1652
    %v1657 = vxor.u32 %v1649, %v1653
    %v1658 = vxor.u32 %v1650, %v1654
    %vm1659 = vcmp.lt.u32.totalorder %v1655, 3435973837
    %vm1660 = vcmp.lt.u32.totalorder %v1656, 3435973837
    %vm1661 = vcmp.lt.u32.totalorder %v1657, 3435973837
    %vm1662 = vcmp.lt.u32.totalorder %v1658, 3435973837
    %v1663 = vsel %vm1659, %v1609, 0.0
    %v1664 = vsel %vm1660, %v1610, 0.0
    %v1665 = vsel %vm1661, %v1611, 0.0
    %v1666 = vsel %vm1662, %v1612, 0.0
    %v1667 = vpack.c.bf16 %v1663, %v1663
    %v1668 = vpack.c.bf16 %v1664, %v1664
    %v1669 = vpack.c.bf16 %v1665, %v1665
    %v1670 = vpack.c.bf16 %v1666, %v1666
    %v1671 = vld [vmem:[#allocation8] sm:$0xf]
    %v1672 = vld [vmem:[#allocation8 + $0x4] sm:$0xf]
    %v1673 = vld [vmem:[#allocation8 + $0x8] sm:$0xf]
    %v1674 = vld [vmem:[#allocation8 + $0xc] sm:$0xf]
    %v1675 = vld [vmem:[#allocation8 + $0x10] sm:$0xf]
    %v1676 = vld [vmem:[#allocation8 + $0x14] sm:$0xf]
    %v1677 = vld [vmem:[#allocation8 + $0x18] sm:$0xf]
    %v1678 = vld [vmem:[#allocation8 + $0x1c] sm:$0xf]
    %v1679 = vld [vmem:[#allocation8 + $0x20] sm:$0xf]
    %v1680 = vld [vmem:[#allocation8 + $0x24] sm:$0xf]
    %v1681 = vld [vmem:[#allocation8 + $0x28] sm:$0xf]
    %v1682 = vld [vmem:[#allocation8 + $0x2c] sm:$0xf]
    %v1683 = vld [vmem:[#allocation8 + $0x30] sm:$0xf]
    %v1684 = vld [vmem:[#allocation8 + $0x34] sm:$0xf]
    %v1685 = vld [vmem:[#allocation8 + $0x38] sm:$0xf]
    %v1686 = vld [vmem:[#allocation8 + $0x3c] sm:$0xf]
    %v1687 = vld [vmem:[#allocation8 + $0x40] sm:$0xf]
    %v1688 = vld [vmem:[#allocation8 + $0x44] sm:$0xf]
    %v1689 = vld [vmem:[#allocation8 + $0x48] sm:$0xf]
    %v1690 = vld [vmem:[#allocation8 + $0x4c] sm:$0xf]
    %v1691 = vld [vmem:[#allocation8 + $0x50] sm:$0xf]
    %v1692 = vld [vmem:[#allocation8 + $0x54] sm:$0xf]
    %v1693 = vld [vmem:[#allocation8 + $0x58] sm:$0xf]
    %v1694 = vld [vmem:[#allocation8 + $0x5c] sm:$0xf]
    %v1695 = vld [vmem:[#allocation8 + $0x60] sm:$0xf]
    %v1696 = vld [vmem:[#allocation8 + $0x64] sm:$0xf]
    %v1697 = vld [vmem:[#allocation8 + $0x68] sm:$0xf]
    %v1698 = vld [vmem:[#allocation8 + $0x6c] sm:$0xf]
    %v1699 = vld [vmem:[#allocation8 + $0x70] sm:$0xf]
    %v1700 = vld [vmem:[#allocation8 + $0x74] sm:$0xf]
    %v1701 = vld [vmem:[#allocation8 + $0x78] sm:$0xf]
    %v1702 = vld [vmem:[#allocation8 + $0x7c] sm:$0xf]
    %v1703 = vld [vmem:[#allocation8 + $0x80] sm:$0xf]
    %v1704 = vld [vmem:[#allocation8 + $0x84] sm:$0xf]
    %v1705 = vld [vmem:[#allocation8 + $0x88] sm:$0xf]
    %v1706 = vld [vmem:[#allocation8 + $0x8c] sm:$0xf]
    %v1707 = vld [vmem:[#allocation8 + $0x90] sm:$0xf]
    %v1708 = vld [vmem:[#allocation8 + $0x94] sm:$0xf]
    %v1709 = vld [vmem:[#allocation8 + $0x98] sm:$0xf]
    %v1710 = vld [vmem:[#allocation8 + $0x9c] sm:$0xf]
    %v1711 = vld [vmem:[#allocation8 + $0xa0] sm:$0xf]
    %v1712 = vld [vmem:[#allocation8 + $0xa4] sm:$0xf]
    %v1713 = vld [vmem:[#allocation8 + $0xa8] sm:$0xf]
    %v1714 = vld [vmem:[#allocation8 + $0xac] sm:$0xf]
    %v1715 = vld [vmem:[#allocation8 + $0xb0] sm:$0xf]
    %v1716 = vld [vmem:[#allocation8 + $0xb4] sm:$0xf]
    %v1717 = vld [vmem:[#allocation8 + $0xb8] sm:$0xf]
    %v1718 = vld [vmem:[#allocation8 + $0xbc] sm:$0xf]
    %v1719 = vld [vmem:[#allocation8 + $0xc0] sm:$0xf]
    %v1720 = vld [vmem:[#allocation8 + $0xc4] sm:$0xf]
    %v1721 = vld [vmem:[#allocation8 + $0xc8] sm:$0xf]
    %v1722 = vld [vmem:[#allocation8 + $0xcc] sm:$0xf]
    %v1723 = vld [vmem:[#allocation8 + $0xd0] sm:$0xf]
    %v1724 = vld [vmem:[#allocation8 + $0xd4] sm:$0xf]
    %v1725 = vld [vmem:[#allocation8 + $0xd8] sm:$0xf]
    %v1726 = vld [vmem:[#allocation8 + $0xdc] sm:$0xf]
    %v1727 = vld [vmem:[#allocation8 + $0xe0] sm:$0xf]
    %v1728 = vld [vmem:[#allocation8 + $0xe4] sm:$0xf]
    %v1729 = vld [vmem:[#allocation8 + $0xe8] sm:$0xf]
    %v1730 = vld [vmem:[#allocation8 + $0xec] sm:$0xf]
    %v1731 = vld [vmem:[#allocation8 + $0xf0] sm:$0xf]
    %v1732 = vld [vmem:[#allocation8 + $0xf4] sm:$0xf]
    %v1733 = vld [vmem:[#allocation8 + $0xf8] sm:$0xf]
    %v1734 = vld [vmem:[#allocation8 + $0xfc] sm:$0xf]
    %v1735 = vld [vmem:[%s5] sm:$0x1]
    %v1737 = vlaneseq
    %v1738 = vshrl.u32 %v1737, 7
    %v1739 = vsub.s32 0, %v1738
    %v1740 = vrot.slane %v1735, %v1739
    %v1806 = vunpack.c.l.b16 %v1671
    %v1807 = vunpack.c.l.b16 %v1672
    %v1808 = vunpack.c.l.b16 %v1673
    %v1809 = vunpack.c.l.b16 %v1674
    %v1810 = vunpack.c.l.b16 %v1675
    %v1811 = vunpack.c.l.b16 %v1676
    %v1812 = vunpack.c.l.b16 %v1677
    %v1813 = vunpack.c.l.b16 %v1678
    %v1814 = vunpack.c.l.b16 %v1679
    %v1815 = vunpack.c.l.b16 %v1680
    %v1816 = vunpack.c.l.b16 %v1681
    %v1817 = vunpack.c.l.b16 %v1682
    %v1818 = vunpack.c.l.b16 %v1683
    %v1819 = vunpack.c.l.b16 %v1684
    %v1820 = vunpack.c.l.b16 %v1685
    %v1821 = vunpack.c.l.b16 %v1686
    %v1822 = vunpack.c.l.b16 %v1687
    %v1823 = vunpack.c.l.b16 %v1688
    %v1824 = vunpack.c.l.b16 %v1689
    %v1825 = vunpack.c.l.b16 %v1690
    %v1826 = vunpack.c.l.b16 %v1691
    %v1827 = vunpack.c.l.b16 %v1692
    %v1828 = vunpack.c.l.b16 %v1693
    %v1829 = vunpack.c.l.b16 %v1694
    %v1830 = vunpack.c.l.b16 %v1695
    %v1831 = vunpack.c.l.b16 %v1696
    %v1832 = vunpack.c.l.b16 %v1697
    %v1833 = vunpack.c.l.b16 %v1698
    %v1834 = vunpack.c.l.b16 %v1699
    %v1835 = vunpack.c.l.b16 %v1700
    %v1836 = vunpack.c.l.b16 %v1701
    %v1837 = vunpack.c.l.b16 %v1702
    %v1838 = vunpack.c.l.b16 %v1703
    %v1839 = vunpack.c.l.b16 %v1704
    %v1840 = vunpack.c.l.b16 %v1705
    %v1841 = vunpack.c.l.b16 %v1706
    %v1842 = vunpack.c.l.b16 %v1707
    %v1843 = vunpack.c.l.b16 %v1708
    %v1844 = vunpack.c.l.b16 %v1709
    %v1845 = vunpack.c.l.b16 %v1710
    %v1846 = vunpack.c.l.b16 %v1711
    %v1847 = vunpack.c.l.b16 %v1712
    %v1848 = vunpack.c.l.b16 %v1713
    %v1849 = vunpack.c.l.b16 %v1714
    %v1850 = vunpack.c.l.b16 %v1715
    %v1851 = vunpack.c.l.b16 %v1716
    %v1852 = vunpack.c.l.b16 %v1717
    %v1853 = vunpack.c.l.b16 %v1718
    %v1854 = vunpack.c.l.b16 %v1719
    %v1855 = vunpack.c.l.b16 %v1720
    %v1856 = vunpack.c.l.b16 %v1721
    %v1857 = vunpack.c.l.b16 %v1722
    %v1858 = vunpack.c.l.b16 %v1723
    %v1859 = vunpack.c.l.b16 %v1724
    %v1860 = vunpack.c.l.b16 %v1725
    %v1861 = vunpack.c.l.b16 %v1726
    %v1862 = vunpack.c.l.b16 %v1727
    %v1863 = vunpack.c.l.b16 %v1728
    %v1864 = vunpack.c.l.b16 %v1729
    %v1865 = vunpack.c.l.b16 %v1730
    %v1866 = vunpack.c.l.b16 %v1731
    %v1867 = vunpack.c.l.b16 %v1732
    %v1868 = vunpack.c.l.b16 %v1733
    %v1869 = vunpack.c.l.b16 %v1734
    %v1870 = vpack.c.b16 %v1807, %v1806
    %v1871 = vpack.c.b16 %v1809, %v1808
    %v1872 = vpack.c.b16 %v1811, %v1810
    %v1873 = vpack.c.b16 %v1813, %v1812
    %v1874 = vpack.c.b16 %v1815, %v1814
    %v1875 = vpack.c.b16 %v1817, %v1816
    %v1876 = vpack.c.b16 %v1819, %v1818
    %v1877 = vpack.c.b16 %v1821, %v1820
    %v1878 = vpack.c.b16 %v1823, %v1822
    %v1879 = vpack.c.b16 %v1825, %v1824
    %v1880 = vpack.c.b16 %v1827, %v1826
    %v1881 = vpack.c.b16 %v1829, %v1828
    %v1882 = vpack.c.b16 %v1831, %v1830
    %v1883 = vpack.c.b16 %v1833, %v1832
    %v1884 = vpack.c.b16 %v1835, %v1834
    %v1885 = vpack.c.b16 %v1837, %v1836
    %v1886 = vpack.c.b16 %v1839, %v1838
    %v1887 = vpack.c.b16 %v1841, %v1840
    %v1888 = vpack.c.b16 %v1843, %v1842
    %v1889 = vpack.c.b16 %v1845, %v1844
    %v1890 = vpack.c.b16 %v1847, %v1846
    %v1891 = vpack.c.b16 %v1849, %v1848
    %v1892 = vpack.c.b16 %v1851, %v1850
    %v1893 = vpack.c.b16 %v1853, %v1852
    %v1894 = vpack.c.b16 %v1855, %v1854
    %v1895 = vpack.c.b16 %v1857, %v1856
    %v1896 = vpack.c.b16 %v1859, %v1858
    %v1897 = vpack.c.b16 %v1861, %v1860
    %v1898 = vpack.c.b16 %v1863, %v1862
    %v1899 = vpack.c.b16 %v1865, %v1864
    %v1900 = vpack.c.b16 %v1867, %v1866
    %v1901 = vpack.c.b16 %v1869, %v1868
    %1934 = vmatprep.subr.bf16.mxu0 0
    %1935 = vmatpush1.bf16.msra.mxu0 %v1877
    %1936 = vmatprep.subr.bf16.mxu0 0
    %1937 = vmatpush1.bf16.msra.mxu0 %v1876
    %1938 = vmatprep.subr.bf16.mxu0 0
    %1939 = vmatpush1.bf16.msra.mxu0 %v1875
    %1940 = vmatprep.subr.bf16.mxu0 0
    %1941 = vmatpush1.bf16.msra.mxu0 %v1874
    %1942 = vmatprep.subr.bf16.mxu0 0
    %1943 = vmatpush1.bf16.msra.mxu0 %v1873
    %1944 = vmatprep.subr.bf16.mxu0 0
    %1945 = vmatpush1.bf16.msra.mxu0 %v1872
    %1946 = vmatprep.subr.bf16.mxu0 0
    %1947 = vmatpush1.bf16.msra.mxu0 %v1871
    %1948 = vmatprep.subr.bf16.mxu0 0
    %1949 = vmatpush1.bf16.msra.mxu0 %v1870
    %1950 = vmatprep.subr.bf16.mxu0 0
    %1951 = vmatpush2.bf16.msra.mxu0 %v1885
    %1952 = vmatprep.subr.bf16.mxu0 0
    %1953 = vmatpush2.bf16.msra.mxu0 %v1884
    %1954 = vmatprep.subr.bf16.mxu0 0
    %1955 = vmatpush2.bf16.msra.mxu0 %v1883
    %1956 = vmatprep.subr.bf16.mxu0 0
    %1957 = vmatpush2.bf16.msra.mxu0 %v1882
    %1958 = vmatprep.subr.bf16.mxu0 0
    %1959 = vmatpush2.bf16.msra.mxu0 %v1881
    %1960 = vmatprep.subr.bf16.mxu0 0
    %1961 = vmatpush2.bf16.msra.mxu0 %v1880
    %1962 = vmatprep.subr.bf16.mxu0 0
    %1963 = vmatpush2.bf16.msra.mxu0 %v1879
    %1964 = vmatprep.subr.bf16.mxu0 0
    %1965 = vmatpush2.bf16.msra.mxu0 %v1878
    %1966 = vmatprep.mubr.bf16.mxu0 %v1668
    %1967 = vmatmul.mubr.bf16.gmra.mxu0 %v1667
    %v1968 = vpop.f32.mrf.mxu0
    %v1969 = vadd.f32 %v1740, %v1968
    %v1970 = vpop.f32.mrf.mxu0
    %v1971 = vpop.f32.mrf.mxu0
    %v1972 = vpop.f32.mrf.mxu0
    %1973 = vdwg.mxu0
    %1974 = vmatprep.subr.bf16.mxu0 0
    %1975 = vmatpush1.bf16.msra.mxu0 %v1893
    %1976 = vmatprep.subr.bf16.mxu0 0
    %1977 = vmatpush1.bf16.msra.mxu0 %v1892
    %1978 = vmatprep.subr.bf16.mxu0 0
    %1979 = vmatpush1.bf16.msra.mxu0 %v1891
    %1980 = vmatprep.subr.bf16.mxu0 0
    %1981 = vmatpush1.bf16.msra.mxu0 %v1890
    %1982 = vmatprep.subr.bf16.mxu0 0
    %1983 = vmatpush1.bf16.msra.mxu0 %v1889
    %1984 = vmatprep.subr.bf16.mxu0 0
    %1985 = vmatpush1.bf16.msra.mxu0 %v1888
    %1986 = vmatprep.subr.bf16.mxu0 0
    %1987 = vmatpush1.bf16.msra.mxu0 %v1887
    %1988 = vmatprep.subr.bf16.mxu0 0
    %1989 = vmatpush1.bf16.msra.mxu0 %v1886
    %1990 = vmatprep.subr.bf16.mxu0 0
    %1991 = vmatpush2.bf16.msra.mxu0 %v1901
    %1992 = vmatprep.subr.bf16.mxu0 0
    %1993 = vmatpush2.bf16.msra.mxu0 %v1900
    %1994 = vmatprep.subr.bf16.mxu0 0
    %1995 = vmatpush2.bf16.msra.mxu0 %v1899
    %1996 = vmatprep.subr.bf16.mxu0 0
    %1997 = vmatpush2.bf16.msra.mxu0 %v1898
    %1998 = vmatprep.subr.bf16.mxu0 0
    %1999 = vmatpush2.bf16.msra.mxu0 %v1897
    %2000 = vmatprep.subr.bf16.mxu0 0
    %2001 = vmatpush2.bf16.msra.mxu0 %v1896
    %2002 = vmatprep.subr.bf16.mxu0 0
    %2003 = vmatpush2.bf16.msra.mxu0 %v1895
    %2004 = vmatprep.subr.bf16.mxu0 0
    %2005 = vmatpush2.bf16.msra.mxu0 %v1894
    %2006 = vmatprep.mubr.bf16.mxu0 %v1670
    %2007 = vmatmul.mubr.bf16.gmra.mxu0 %v1669
    %v2008 = vpop.f32.mrf.mxu0
    %v2009 = vadd.f32 %v1969, %v2008
    %v2010 = vpop.f32.mrf.mxu0
    %v2011 = vpop.f32.mrf.mxu0
    %v2012 = vpop.f32.mrf.mxu0
    %2013 = vdwg.mxu0
    %v2014 = vxor.u32 %v2009, 2147483648
    %v2015 = vmul.f32 %v2014, 1.442695
    %v2016 = vpow.pop %v2015
    %v2017 = vadd.f32 %v2016, 1.0
    %v2018 = vrcp.pop %v2017
    %v2019 = vmul.f32 1.0, %v2018
    %v2020 = vmul.f32 %v2019, 10000.0
    %v2021 = vround.ne.pseudo %v2020
    %v2022 = vmul.f32 %v2021, 0.0001
    %2023 = vst [vmem:[#allocation9] sm:$0xff] %v2022
    // Predicated region
    $region38: #{mlp_forward.1} parent=1 // pred_check
      _
    $region39: #{mlp_forward.1} parent=1 // pred_check_branch
      %2025 = sbr.rel (0) target = $region41
    $region40: #{mlp_forward.1} parent=1 // pred_region
      %s2027 = ssub.s32 128, 128
      %2028 = vsyncadd [#allocation5], %s2027
      %s2030 = sshll.u32 [#allocation9], 4
      %s2031 = int_to_ptr.vmem [resolvable:$true] %s2030
      %2033 = dma.vmem_to_hbm [thread:$0]  %s2031, 128, %s6, [#allocation5]
    $region41: #{mlp_forward.1} parent=1 // pred_fallthru
      _
    // Predicated region
    $region42: #{mlp_forward.1} parent=1 // pred_check
      _
    $region43: #{mlp_forward.1} parent=1 // pred_check_branch
      %2035 = sbr.rel (0) target = $region45
    $region44: #{mlp_forward.1} parent=1 // pred_region
      %2036 = dma.done [#allocation5], 128
    $region45: #{mlp_forward.1} parent=1 // pred_fallthru
      _
    %2037 = vsyncpa [#allocation4], 1
    %2038 = vsyncpa [#allocation7], 1
    %2039 = vsyncpa [#allocation5], 1

</llo_original>
